<compile_context>
chip_gen: v5e
topology: v5e:2x2
jax: 0.10.0
libtpu: 0.0.40
codegen_flags: <defaults>
</compile_context>

<pallas_src>
import functools

import jax
import jax.numpy as jnp
from jax.experimental import pallas as pl
from jax.experimental.pallas import tpu as pltpu

HIDDEN = 100
IN_DIM = 2
OUT_DIM = 3
PAD = 128            # lane-padded hidden width
IN_PAD = 8           # lane-padded input width  (2 -> 8)
OUT_PAD = 8          # lane-padded output width (3 -> 8)
DEFAULT_TB_CAP = 4096  # max batch rows per grid step (multiple of 256)
MAX_TB_CAP = 8192      # hard cap (v7x: 64 MiB VMEM)
VMEM_LIMIT_BYTES = 32 * 1024 * 1024


def _cdiv(a, b):
    return -(-a // b)


def _round_up(n, m):
    return ((n + m - 1) // m) * m


@functools.lru_cache(maxsize=1)
def _use_bf16_tanh():
    """bf16 tanh only where the EUP has a packed bf16 path (v6e / v7x)."""
    try:
        kind = jax.devices()[0].device_kind.lower()
    except Exception:
        return False
    return ("v6" in kind) or ("v7" in kind)


def _choose_tiling(n, tb_cap):
    """Pick (tb, n_pad): tb % 8 == 0, >= 2 grid steps, minimal over-padding."""
    tb_cap = max(8, _round_up(min(int(tb_cap), MAX_TB_CAP), 8))
    n8 = _round_up(max(int(n), 1), 8)
    g = max(2, _cdiv(n8, tb_cap))        # >= 2 steps -> both v7x TCs busy
    tb = _round_up(_cdiv(n8, g), 8)      # smallest 8-aligned tile covering n in g steps
    n_pad = tb * g
    return tb, n_pad


def pinn_kernel(x_ref, *refs, bf16_tanh):
    """refs = (w1, b1, ..., w8, b8, out_ref).

    x_ref: (TB, 8) bf16; w1: (8, 128), w2..w7: (128, 128), w8: (128, 8) bf16;
    biases: (1, 128)/(1, 8) f32; out_ref: (TB, 8) f32.
    Padded lanes stay exactly zero (zero weight cols/rows, zero bias, tanh(0)=0).
    """
    out_ref = refs[-1]
    p = refs[:-1]

    h = x_ref[...]  # (TB, 8) bf16
    # layers 1..7: bf16 MXU matmul (f32 accumulate) + f32 bias + tanh
    for i in range(7):
        w = p[2 * i][...]
        b = p[2 * i + 1][...]
        pre = jnp.dot(h, w, preferred_element_type=jnp.float32) + b
        if bf16_tanh:
            h = jnp.tanh(pre.astype(jnp.bfloat16))      # packed bf16 EUP (v6e/v7x)
        else:
            h = jnp.tanh(pre).astype(jnp.bfloat16)      # f32 EUP (v5e & fallback)
    # layer 8: linear, narrow (128 -> 8) output; exp(A) happens in the wrapper.
    out_ref[...] = (
        jnp.dot(h, p[14][...], preferred_element_type=jnp.float32) + p[15][...]
    )


def init_params(key):
    """Deterministic xavier_normal weights, zero biases. Weights stored (in, out)."""
    dims = [IN_DIM] + [HIDDEN] * 7 + [OUT_DIM]
    params = []
    for i in range(8):
        key, wk = jax.random.split(key)
        fan_in, fan_out = dims[i], dims[i + 1]
        std = jnp.sqrt(2.0 / (fan_in + fan_out))
        w = jax.random.normal(wk, (fan_in, fan_out), jnp.float32) * std
        b = jnp.zeros((fan_out,), jnp.float32)
        params.append((w, b))
    return params


def _pad_params(params):
    """Zero-pad layers: W1 -> (8,128), W2..W7 -> (128,128), W8 -> (128,8).

    Weights bf16, biases f32.
    """
    flat = []
    n_layers = len(params)
    for li, (w, b) in enumerate(params):
        in_d, out_d = w.shape
        rows = IN_PAD if li == 0 else PAD
        cols = OUT_PAD if li == n_layers - 1 else PAD
        wp = (jnp.zeros((rows, cols), jnp.bfloat16)
              .at[:in_d, :out_d].set(w.astype(jnp.bfloat16)))
        bp = jnp.zeros((1, cols), jnp.float32).at[0, :out_d].set(b)
        flat += [wp, bp]
    return flat


@functools.partial(jax.jit, static_argnames=("tb", "bf16_tanh"))
def _pinn_call(x_pad, *flat_params, tb, bf16_tanh):
    n_pad = x_pad.shape[0]
    grid = n_pad // tb

    # x / out tiled along the batch; weights & biases VMEM-resident
    # (constant block index across the grid -> DMA'd once).
    in_specs = [pl.BlockSpec((tb, IN_PAD), lambda i: (i, 0))]
    for prm in flat_params:
        in_specs.append(pl.BlockSpec(prm.shape, lambda i: (0, 0)))
    out_spec = pl.BlockSpec((tb, OUT_PAD), lambda i: (i, 0))

    param_bytes = sum(int(prm.size) * prm.dtype.itemsize for prm in flat_params)
    cost = pl.CostEstimate(
        flops=2 * n_pad * (IN_PAD * PAD + 6 * PAD * PAD + PAD * OUT_PAD),
        transcendentals=7 * n_pad * PAD,
        bytes_accessed=n_pad * (IN_PAD * 2 + OUT_PAD * 4) + param_bytes,
    )

    return pl.pallas_call(
        functools.partial(pinn_kernel, bf16_tanh=bf16_tanh),
        out_shape=jax.ShapeDtypeStruct((n_pad, OUT_PAD), jnp.float32),
        grid_spec=pltpu.PrefetchScalarGridSpec(
            num_scalar_prefetch=0,
            grid=(grid,),
            in_specs=in_specs,
            out_specs=out_spec,
        ),
        compiler_params=pltpu.CompilerParams(
            dimension_semantics=("parallel",),      # batch tiles independent -> megacore
            vmem_limit_bytes=VMEM_LIMIT_BYTES,      # headroom for big tiles on v5e/v7x
        ),
        cost_estimate=cost,
    )(x_pad, *flat_params)


def pinn_forward(x, flat_params, *, tb=DEFAULT_TB_CAP):
    """x: (n, 2) f32 -> (A, u, p) each (n, 1) f32."""
    n = x.shape[0]
    tb_step, n_pad = _choose_tiling(n, tb)
    x_pad = (jnp.zeros((n_pad, IN_PAD), jnp.bfloat16)
             .at[:n, :IN_DIM].set(x.astype(jnp.bfloat16)))
    out = _pinn_call(x_pad, *flat_params, tb=tb_step,
                     bf16_tanh=_use_bf16_tanh())[:n]
    A = jnp.exp(out[:, 0:1])
    u = out[:, 1:2]
    p = out[:, 2:3]
    return A, u, p


# --------------------------- references for testing ---------------------------

def pinn_reference_f32(x, params):
    h = x
    for w, b in params[:-1]:
        h = jnp.tanh(h @ w + b)
    w, b = params[-1]
    out = h @ w + b
    return jnp.exp(out[:, 0:1]), out[:, 1:2], out[:, 2:3]


def pinn_reference_mixed(x, params, bf16_tanh):
    """Mirrors the kernel's mixed precision (bf16 matmul, f32 acc, bf16/f32 tanh)."""
    h = x.astype(jnp.bfloat16)
    for w, b in params[:-1]:
        pre = jnp.dot(h, w.astype(jnp.bfloat16),
                      preferred_element_type=jnp.float32) + b
        if bf16_tanh:
            h = jnp.tanh(pre.astype(jnp.bfloat16))
        else:
            h = jnp.tanh(pre).astype(jnp.bfloat16)
    w, b = params[-1]
    out = jnp.dot(h, w.astype(jnp.bfloat16),
                  preferred_element_type=jnp.float32) + b
    return jnp.exp(out[:, 0:1]), out[:, 1:2], out[:, 2:3]


if __name__ == "__main__":
    key = jax.random.PRNGKey(0)
    pkey, xkey = jax.random.split(key)
    params = init_params(pkey)
    flat = _pad_params(params)
    bf16_tanh = _use_bf16_tanh()

    # Case 1: batch not a multiple of the tile cap -> multi-step grid (tb=56, grid=4).
    batch = 200
    x = jax.random.normal(xkey, (batch, IN_DIM), jnp.float32)
    A, u, p = pinn_forward(x, flat, tb=64)
    jax.block_until_ready((A, u, p))
    assert A.shape == (batch, 1) and u.shape == (batch, 1) and p.shape == (batch, 1)

    # Check vs. a reference mirroring the kernel's mixed precision.
    A_m, u_m, p_m = pinn_reference_mixed(x, params, bf16_tanh)
    assert jnp.allclose(A, A_m, atol=2e-2, rtol=2e-2)
    assert jnp.allclose(u, u_m, atol=2e-2, rtol=2e-2)
    assert jnp.allclose(p, p_m, atol=2e-2, rtol=2e-2)

    # Loose sanity check vs. the full-f32 reference (bf16 rounding through 8 layers).
    A_f, u_f, p_f = pinn_reference_f32(x, params)
    assert jnp.allclose(A, A_f, atol=8e-2, rtol=8e-2)
    assert jnp.allclose(u, u_f, atol=8e-2, rtol=8e-2)
    assert jnp.allclose(p, p_f, atol=8e-2, rtol=8e-2)

    # Case 2: tiny batch, default tile cap (still >= 2 grid steps for v7x megacore).
    x2 = jax.random.normal(jax.random.fold_in(xkey, 1), (8, IN_DIM), jnp.float32)
    A2, u2, p2 = pinn_forward(x2, flat)
    jax.block_until_ready((A2, u2, p2))
    A2_m, u2_m, p2_m = pinn_reference_mixed(x2, params, bf16_tanh)
    assert jnp.allclose(A2, A2_m, atol=2e-2, rtol=2e-2)
    assert jnp.allclose(u2, u2_m, atol=2e-2, rtol=2e-2)
    assert jnp.allclose(p2, p2_m, atol=2e-2, rtol=2e-2)

    print("KERNEL_OK")
</pallas_src>

<mosaic_0001>
module attributes {stable_mosaic.version = 11 : i64} {
  func.func @pinn_kernel(%arg0: i32, %arg1: memref<56x8xbf16, #tpu.memory_space<vmem>>, %arg2: memref<8x128xbf16, #tpu.memory_space<vmem>>, %arg3: memref<1x128xf32, #tpu.memory_space<vmem>>, %arg4: memref<128x128xbf16, #tpu.memory_space<vmem>>, %arg5: memref<1x128xf32, #tpu.memory_space<vmem>>, %arg6: memref<128x128xbf16, #tpu.memory_space<vmem>>, %arg7: memref<1x128xf32, #tpu.memory_space<vmem>>, %arg8: memref<128x128xbf16, #tpu.memory_space<vmem>>, %arg9: memref<1x128xf32, #tpu.memory_space<vmem>>, %arg10: memref<128x128xbf16, #tpu.memory_space<vmem>>, %arg11: memref<1x128xf32, #tpu.memory_space<vmem>>, %arg12: memref<128x128xbf16, #tpu.memory_space<vmem>>, %arg13: memref<1x128xf32, #tpu.memory_space<vmem>>, %arg14: memref<128x128xbf16, #tpu.memory_space<vmem>>, %arg15: memref<1x128xf32, #tpu.memory_space<vmem>>, %arg16: memref<128x8xbf16, #tpu.memory_space<vmem>>, %arg17: memref<1x8xf32, #tpu.memory_space<vmem>>, %arg18: memref<56x8xf32, #tpu.memory_space<vmem>>) attributes {dimension_semantics = [#tpu.dimension_semantics<parallel>], iteration_bounds = array<i64: 4>, scalar_prefetch = 0 : i64, scratch_operands = 0 : i64, tpu.core_type = #tpu.core_type<tc>, window_params = [{transform_indices = @transform_0, window_bounds = array<i64: 56, 8>}, {pipeline_mode = #tpu.pipeline_mode<synchronous>, transform_indices = @transform_1, window_bounds = array<i64: 8, 128>}, {pipeline_mode = #tpu.pipeline_mode<synchronous>, transform_indices = @transform_2, window_bounds = array<i64: 1, 128>}, {pipeline_mode = #tpu.pipeline_mode<synchronous>, transform_indices = @transform_3, window_bounds = array<i64: 128, 128>}, {pipeline_mode = #tpu.pipeline_mode<synchronous>, transform_indices = @transform_4, window_bounds = array<i64: 1, 128>}, {pipeline_mode = #tpu.pipeline_mode<synchronous>, transform_indices = @transform_5, window_bounds = array<i64: 128, 128>}, {pipeline_mode = #tpu.pipeline_mode<synchronous>, transform_indices = @transform_6, window_bounds = array<i64: 1, 128>}, {pipeline_mode = #tpu.pipeline_mode<synchronous>, transform_indices = @transform_7, window_bounds = array<i64: 128, 128>}, {pipeline_mode = #tpu.pipeline_mode<synchronous>, transform_indices = @transform_8, window_bounds = array<i64: 1, 128>}, {pipeline_mode = #tpu.pipeline_mode<synchronous>, transform_indices = @transform_9, window_bounds = array<i64: 128, 128>}, {pipeline_mode = #tpu.pipeline_mode<synchronous>, transform_indices = @transform_10, window_bounds = array<i64: 1, 128>}, {pipeline_mode = #tpu.pipeline_mode<synchronous>, transform_indices = @transform_11, window_bounds = array<i64: 128, 128>}, {pipeline_mode = #tpu.pipeline_mode<synchronous>, transform_indices = @transform_12, window_bounds = array<i64: 1, 128>}, {pipeline_mode = #tpu.pipeline_mode<synchronous>, transform_indices = @transform_13, window_bounds = array<i64: 128, 128>}, {pipeline_mode = #tpu.pipeline_mode<synchronous>, transform_indices = @transform_14, window_bounds = array<i64: 1, 128>}, {pipeline_mode = #tpu.pipeline_mode<synchronous>, transform_indices = @transform_15, window_bounds = array<i64: 128, 8>}, {pipeline_mode = #tpu.pipeline_mode<synchronous>, transform_indices = @transform_16, window_bounds = array<i64: 1, 8>}, {transform_indices = @transform_17, window_bounds = array<i64: 56, 8>}]} {
    %c0 = arith.constant 0 : index
    %c0_0 = arith.constant 0 : index
    %0 = vector.load %arg1[%c0, %c0_0] : memref<56x8xbf16, #tpu.memory_space<vmem>>, vector<56x8xbf16>
    %c0_1 = arith.constant 0 : index
    %c0_2 = arith.constant 0 : index
    %1 = vector.load %arg2[%c0_1, %c0_2] : memref<8x128xbf16, #tpu.memory_space<vmem>>, vector<8x128xbf16>
    %c0_3 = arith.constant 0 : index
    %c0_4 = arith.constant 0 : index
    %2 = vector.load %arg3[%c0_3, %c0_4] : memref<1x128xf32, #tpu.memory_space<vmem>>, vector<1x128xf32>
    %cst = arith.constant dense<0.000000e+00> : vector<56x128xf32>
    %3 = tpu.matmul %0, %1, %cst {dimension_numbers = #tpu.dot_dimension_numbers<[1], [0], [0], [1], [0, 0, 1, 1], [], []>} : vector<56x8xbf16>, vector<8x128xbf16>, vector<56x128xf32> -> vector<56x128xf32>
    %4 = vector.broadcast %2 : vector<1x128xf32> to vector<56x128xf32>
    %5 = arith.addf %3, %4 : vector<56x128xf32>
    %6 = math.tanh %5 : vector<56x128xf32>
    %7 = arith.truncf %6 : vector<56x128xf32> to vector<56x128xbf16>
    %c0_5 = arith.constant 0 : index
    %c0_6 = arith.constant 0 : index
    %8 = vector.load %arg4[%c0_5, %c0_6] : memref<128x128xbf16, #tpu.memory_space<vmem>>, vector<128x128xbf16>
    %c0_7 = arith.constant 0 : index
    %c0_8 = arith.constant 0 : index
    %9 = vector.load %arg5[%c0_7, %c0_8] : memref<1x128xf32, #tpu.memory_space<vmem>>, vector<1x128xf32>
    %cst_9 = arith.constant dense<0.000000e+00> : vector<56x128xf32>
    %10 = tpu.matmul %7, %8, %cst_9 {dimension_numbers = #tpu.dot_dimension_numbers<[1], [0], [0], [1], [0, 0, 1, 1], [], []>} : vector<56x128xbf16>, vector<128x128xbf16>, vector<56x128xf32> -> vector<56x128xf32>
    %11 = vector.broadcast %9 : vector<1x128xf32> to vector<56x128xf32>
    %12 = arith.addf %10, %11 : vector<56x128xf32>
    %13 = math.tanh %12 : vector<56x128xf32>
    %14 = arith.truncf %13 : vector<56x128xf32> to vector<56x128xbf16>
    %c0_10 = arith.constant 0 : index
    %c0_11 = arith.constant 0 : index
    %15 = vector.load %arg6[%c0_10, %c0_11] : memref<128x128xbf16, #tpu.memory_space<vmem>>, vector<128x128xbf16>
    %c0_12 = arith.constant 0 : index
    %c0_13 = arith.constant 0 : index
    %16 = vector.load %arg7[%c0_12, %c0_13] : memref<1x128xf32, #tpu.memory_space<vmem>>, vector<1x128xf32>
    %cst_14 = arith.constant dense<0.000000e+00> : vector<56x128xf32>
    %17 = tpu.matmul %14, %15, %cst_14 {dimension_numbers = #tpu.dot_dimension_numbers<[1], [0], [0], [1], [0, 0, 1, 1], [], []>} : vector<56x128xbf16>, vector<128x128xbf16>, vector<56x128xf32> -> vector<56x128xf32>
    %18 = vector.broadcast %16 : vector<1x128xf32> to vector<56x128xf32>
    %19 = arith.addf %17, %18 : vector<56x128xf32>
    %20 = math.tanh %19 : vector<56x128xf32>
    %21 = arith.truncf %20 : vector<56x128xf32> to vector<56x128xbf16>
    %c0_15 = arith.constant 0 : index
    %c0_16 = arith.constant 0 : index
    %22 = vector.load %arg8[%c0_15, %c0_16] : memref<128x128xbf16, #tpu.memory_space<vmem>>, vector<128x128xbf16>
    %c0_17 = arith.constant 0 : index
    %c0_18 = arith.constant 0 : index
    %23 = vector.load %arg9[%c0_17, %c0_18] : memref<1x128xf32, #tpu.memory_space<vmem>>, vector<1x128xf32>
    %cst_19 = arith.constant dense<0.000000e+00> : vector<56x128xf32>
    %24 = tpu.matmul %21, %22, %cst_19 {dimension_numbers = #tpu.dot_dimension_numbers<[1], [0], [0], [1], [0, 0, 1, 1], [], []>} : vector<56x128xbf16>, vector<128x128xbf16>, vector<56x128xf32> -> vector<56x128xf32>
    %25 = vector.broadcast %23 : vector<1x128xf32> to vector<56x128xf32>
    %26 = arith.addf %24, %25 : vector<56x128xf32>
    %27 = math.tanh %26 : vector<56x128xf32>
    %28 = arith.truncf %27 : vector<56x128xf32> to vector<56x128xbf16>
    %c0_20 = arith.constant 0 : index
    %c0_21 = arith.constant 0 : index
    %29 = vector.load %arg10[%c0_20, %c0_21] : memref<128x128xbf16, #tpu.memory_space<vmem>>, vector<128x128xbf16>
    %c0_22 = arith.constant 0 : index
    %c0_23 = arith.constant 0 : index
    %30 = vector.load %arg11[%c0_22, %c0_23] : memref<1x128xf32, #tpu.memory_space<vmem>>, vector<1x128xf32>
    %cst_24 = arith.constant dense<0.000000e+00> : vector<56x128xf32>
    %31 = tpu.matmul %28, %29, %cst_24 {dimension_numbers = #tpu.dot_dimension_numbers<[1], [0], [0], [1], [0, 0, 1, 1], [], []>} : vector<56x128xbf16>, vector<128x128xbf16>, vector<56x128xf32> -> vector<56x128xf32>
    %32 = vector.broadcast %30 : vector<1x128xf32> to vector<56x128xf32>
    %33 = arith.addf %31, %32 : vector<56x128xf32>
    %34 = math.tanh %33 : vector<56x128xf32>
    %35 = arith.truncf %34 : vector<56x128xf32> to vector<56x128xbf16>
    %c0_25 = arith.constant 0 : index
    %c0_26 = arith.constant 0 : index
    %36 = vector.load %arg12[%c0_25, %c0_26] : memref<128x128xbf16, #tpu.memory_space<vmem>>, vector<128x128xbf16>
    %c0_27 = arith.constant 0 : index
    %c0_28 = arith.constant 0 : index
    %37 = vector.load %arg13[%c0_27, %c0_28] : memref<1x128xf32, #tpu.memory_space<vmem>>, vector<1x128xf32>
    %cst_29 = arith.constant dense<0.000000e+00> : vector<56x128xf32>
    %38 = tpu.matmul %35, %36, %cst_29 {dimension_numbers = #tpu.dot_dimension_numbers<[1], [0], [0], [1], [0, 0, 1, 1], [], []>} : vector<56x128xbf16>, vector<128x128xbf16>, vector<56x128xf32> -> vector<56x128xf32>
    %39 = vector.broadcast %37 : vector<1x128xf32> to vector<56x128xf32>
    %40 = arith.addf %38, %39 : vector<56x128xf32>
    %41 = math.tanh %40 : vector<56x128xf32>
    %42 = arith.truncf %41 : vector<56x128xf32> to vector<56x128xbf16>
    %c0_30 = arith.constant 0 : index
    %c0_31 = arith.constant 0 : index
    %43 = vector.load %arg14[%c0_30, %c0_31] : memref<128x128xbf16, #tpu.memory_space<vmem>>, vector<128x128xbf16>
    %c0_32 = arith.constant 0 : index
    %c0_33 = arith.constant 0 : index
    %44 = vector.load %arg15[%c0_32, %c0_33] : memref<1x128xf32, #tpu.memory_space<vmem>>, vector<1x128xf32>
    %cst_34 = arith.constant dense<0.000000e+00> : vector<56x128xf32>
    %45 = tpu.matmul %42, %43, %cst_34 {dimension_numbers = #tpu.dot_dimension_numbers<[1], [0], [0], [1], [0, 0, 1, 1], [], []>} : vector<56x128xbf16>, vector<128x128xbf16>, vector<56x128xf32> -> vector<56x128xf32>
    %46 = vector.broadcast %44 : vector<1x128xf32> to vector<56x128xf32>
    %47 = arith.addf %45, %46 : vector<56x128xf32>
    %48 = math.tanh %47 : vector<56x128xf32>
    %49 = arith.truncf %48 : vector<56x128xf32> to vector<56x128xbf16>
    %c0_35 = arith.constant 0 : index
    %c0_36 = arith.constant 0 : index
    %50 = vector.load %arg16[%c0_35, %c0_36] : memref<128x8xbf16, #tpu.memory_space<vmem>>, vector<128x8xbf16>
    %cst_37 = arith.constant dense<0.000000e+00> : vector<56x8xf32>
    %51 = tpu.matmul %49, %50, %cst_37 {dimension_numbers = #tpu.dot_dimension_numbers<[1], [0], [0], [1], [0, 0, 1, 1], [], []>} : vector<56x128xbf16>, vector<128x8xbf16>, vector<56x8xf32> -> vector<56x8xf32>
    %c0_38 = arith.constant 0 : index
    %c0_39 = arith.constant 0 : index
    %52 = vector.load %arg17[%c0_38, %c0_39] : memref<1x8xf32, #tpu.memory_space<vmem>>, vector<1x8xf32>
    %53 = vector.broadcast %52 : vector<1x8xf32> to vector<56x8xf32>
    %54 = arith.addf %51, %53 : vector<56x8xf32>
    %c0_40 = arith.constant 0 : index
    %c0_41 = arith.constant 0 : index
    %55 = vector.load %arg18[%c0_40, %c0_41] : memref<56x8xf32, #tpu.memory_space<vmem>>, vector<56x8xf32>
    tpu.vector_store %arg18[%c0_40, %c0_41], %54 {strides = array<i32>} : memref<56x8xf32, #tpu.memory_space<vmem>>, vector<56x8xf32>,
    return
  }
  func.func @transform_0(%arg0: i32) -> (i32, i32) {
    %c0_i32 = arith.constant 0 : i32
    %c0_i32_0 = arith.constant 0 : i32
    return %arg0, %c0_i32 : i32, i32
  }
  func.func @transform_1(%arg0: i32) -> (i32, i32) {
    %c0_i32 = arith.constant 0 : i32
    %c0_i32_0 = arith.constant 0 : i32
    %c0_i32_1 = arith.constant 0 : i32
    return %c0_i32, %c0_i32_0 : i32, i32
  }
  func.func @transform_2(%arg0: i32) -> (i32, i32) {
    %c0_i32 = arith.constant 0 : i32
    %c0_i32_0 = arith.constant 0 : i32
    %c0_i32_1 = arith.constant 0 : i32
    return %c0_i32, %c0_i32_0 : i32, i32
  }
  func.func @transform_3(%arg0: i32) -> (i32, i32) {
    %c0_i32 = arith.constant 0 : i32
    %c0_i32_0 = arith.constant 0 : i32
    %c0_i32_1 = arith.constant 0 : i32
    return %c0_i32, %c0_i32_0 : i32, i32
  }
  func.func @transform_4(%arg0: i32) -> (i32, i32) {
    %c0_i32 = arith.constant 0 : i32
    %c0_i32_0 = arith.constant 0 : i32
    %c0_i32_1 = arith.constant 0 : i32
    return %c0_i32, %c0_i32_0 : i32, i32
  }
  func.func @transform_5(%arg0: i32) -> (i32, i32) {
    %c0_i32 = arith.constant 0 : i32
    %c0_i32_0 = arith.constant 0 : i32
    %c0_i32_1 = arith.constant 0 : i32
    return %c0_i32, %c0_i32_0 : i32, i32
  }
  func.func @transform_6(%arg0: i32) -> (i32, i32) {
    %c0_i32 = arith.constant 0 : i32
    %c0_i32_0 = arith.constant 0 : i32
    %c0_i32_1 = arith.constant 0 : i32
    return %c0_i32, %c0_i32_0 : i32, i32
  }
  func.func @transform_7(%arg0: i32) -> (i32, i32) {
    %c0_i32 = arith.constant 0 : i32
    %c0_i32_0 = arith.constant 0 : i32
    %c0_i32_1 = arith.constant 0 : i32
    return %c0_i32, %c0_i32_0 : i32, i32
  }
  func.func @transform_8(%arg0: i32) -> (i32, i32) {
    %c0_i32 = arith.constant 0 : i32
    %c0_i32_0 = arith.constant 0 : i32
    %c0_i32_1 = arith.constant 0 : i32
    return %c0_i32, %c0_i32_0 : i32, i32
  }
  func.func @transform_9(%arg0: i32) -> (i32, i32) {
    %c0_i32 = arith.constant 0 : i32
    %c0_i32_0 = arith.constant 0 : i32
    %c0_i32_1 = arith.constant 0 : i32
    return %c0_i32, %c0_i32_0 : i32, i32
  }
  func.func @transform_10(%arg0: i32) -> (i32, i32) {
    %c0_i32 = arith.constant 0 : i32
    %c0_i32_0 = arith.constant 0 : i32
    %c0_i32_1 = arith.constant 0 : i32
    return %c0_i32, %c0_i32_0 : i32, i32
  }
  func.func @transform_11(%arg0: i32) -> (i32, i32) {
    %c0_i32 = arith.constant 0 : i32
    %c0_i32_0 = arith.constant 0 : i32
    %c0_i32_1 = arith.constant 0 : i32
    return %c0_i32, %c0_i32_0 : i32, i32
  }
  func.func @transform_12(%arg0: i32) -> (i32, i32) {
    %c0_i32 = arith.constant 0 : i32
    %c0_i32_0 = arith.constant 0 : i32
    %c0_i32_1 = arith.constant 0 : i32
    return %c0_i32, %c0_i32_0 : i32, i32
  }
  func.func @transform_13(%arg0: i32) -> (i32, i32) {
    %c0_i32 = arith.constant 0 : i32
    %c0_i32_0 = arith.constant 0 : i32
    %c0_i32_1 = arith.constant 0 : i32
    return %c0_i32, %c0_i32_0 : i32, i32
  }
  func.func @transform_14(%arg0: i32) -> (i32, i32) {
    %c0_i32 = arith.constant 0 : i32
    %c0_i32_0 = arith.constant 0 : i32
    %c0_i32_1 = arith.constant 0 : i32
    return %c0_i32, %c0_i32_0 : i32, i32
  }
  func.func @transform_15(%arg0: i32) -> (i32, i32) {
    %c0_i32 = arith.constant 0 : i32
    %c0_i32_0 = arith.constant 0 : i32
    %c0_i32_1 = arith.constant 0 : i32
    return %c0_i32, %c0_i32_0 : i32, i32
  }
  func.func @transform_16(%arg0: i32) -> (i32, i32) {
    %c0_i32 = arith.constant 0 : i32
    %c0_i32_0 = arith.constant 0 : i32
    %c0_i32_1 = arith.constant 0 : i32
    return %c0_i32, %c0_i32_0 : i32, i32
  }
  func.func @transform_17(%arg0: i32) -> (i32, i32) {
    %c0_i32 = arith.constant 0 : i32
    %c0_i32_0 = arith.constant 0 : i32
    return %arg0, %c0_i32 : i32, i32
  }
}

</mosaic_0001>

<llo_original>
// kernel: _pinn_call.1
$region0: #{_pinn_call.1}
  #allocation0 [shape = 'u32[]', space=smem, size = 0x4, offset = 0x4, fixed_abs, tag = 'smem constant byte address 0x4 - core index']
  #allocation1 [shape = 'u32[72,128]{1,0:T(1,128)}', space=vmem, size = 0x9000, scoped, tag = 'internal scratch']
  %s0 = inlined_call_operand.vmem [shape: bf16[224,8], index: 0, kind: input, shape index: {}]
  %s1 = inlined_call_operand.hbm [shape: bf16[8,128], index: 1, kind: input, shape index: {}]
  %s2 = inlined_call_operand.hbm [shape: f32[1,128], index: 2, kind: input, shape index: {}]
  %s3 = inlined_call_operand.vmem [shape: bf16[128,128], index: 3, kind: input, shape index: {}]
  %s4 = inlined_call_operand.hbm [shape: f32[1,128], index: 4, kind: input, shape index: {}]
  %s5 = inlined_call_operand.vmem [shape: bf16[128,128], index: 5, kind: input, shape index: {}]
  %s6 = inlined_call_operand.hbm [shape: f32[1,128], index: 6, kind: input, shape index: {}]
  %s7 = inlined_call_operand.vmem [shape: bf16[128,128], index: 7, kind: input, shape index: {}]
  %s8 = inlined_call_operand.hbm [shape: f32[1,128], index: 8, kind: input, shape index: {}]
  %s9 = inlined_call_operand.hbm [shape: bf16[128,128], index: 9, kind: input, shape index: {}]
  %s10 = inlined_call_operand.hbm [shape: f32[1,128], index: 10, kind: input, shape index: {}]
  %s11 = inlined_call_operand.hbm [shape: bf16[128,128], index: 11, kind: input, shape index: {}]
  %s12 = inlined_call_operand.vmem [shape: f32[1,128], index: 12, kind: input, shape index: {}]
  %s13 = inlined_call_operand.hbm [shape: bf16[128,128], index: 13, kind: input, shape index: {}]
  %s14 = inlined_call_operand.vmem [shape: f32[1,128], index: 14, kind: input, shape index: {}]
  %s15 = inlined_call_operand.vmem [shape: bf16[128,8], index: 15, kind: input, shape index: {}]
  %s16 = inlined_call_operand.vmem [shape: f32[1,8], index: 16, kind: input, shape index: {}]
  %s17 = inlined_call_operand.vmem [shape: f32[224,8], index: 17, kind: output, shape index: {}]
  %s18 = sld [smem:[#allocation0]]
  $region137: #{_pinn_call.1} parent=0
    _
  %s20 = ssub.s32 1, %s18
  %s21 = scalar_select 0, %s20, %s18
  $region1: #{_pinn_call.1} parent=0
    #allocation2 [shape = 'u8[2048]{0}', space=vmem, size = 0x800, scoped, tag = 'input window, operand 1, single buffered']
    #allocation3 [shape = 's32[2]{0}', space=sflag, size = 0x8, scoped, tag = 'scoped memory for _pinn_call.1']
    #allocation4 [shape = 'u8[512]{0}', space=vmem, size = 0x400, scoped, tag = 'input window, operand 2, single buffered']
    #allocation5 [shape = 's32[1]{0}', space=sflag, size = 0x4, scoped, tag = 'scoped memory for _pinn_call.1']
    #allocation6 [shape = 'u8[512]{0}', space=vmem, size = 0x400, scoped, tag = 'input window, operand 4, single buffered']
    #allocation7 [shape = 'u8[512]{0}', space=vmem, size = 0x400, scoped, tag = 'input window, operand 6, single buffered']
    #allocation8 [shape = 's32[1]{0}', space=sflag, size = 0x4, scoped, tag = 'scoped memory for _pinn_call.1']
    #allocation9 [shape = 'u8[512]{0}', space=vmem, size = 0x400, scoped, tag = 'input window, operand 8, single buffered']
    #allocation10 [shape = 'u8[32768]{0}', space=vmem, size = 0x8000, scoped, tag = 'input window, operand 9, single buffered']
    #allocation11 [shape = 's32[1]{0}', space=sflag, size = 0x4, scoped, tag = 'scoped memory for _pinn_call.1']
    #allocation12 [shape = 'u8[512]{0}', space=vmem, size = 0x400, scoped, tag = 'input window, operand 10, single buffered']
    #allocation13 [shape = 'u8[32768]{0}', space=vmem, size = 0x8000, scoped, tag = 'input window, operand 11, single buffered']
    #allocation14 [shape = 's32[1]{0}', space=sflag, size = 0x4, scoped, tag = 'scoped memory for _pinn_call.1']
    #allocation15 [shape = 'u8[32768]{0}', space=vmem, size = 0x8000, scoped, tag = 'input window, operand 13, single buffered']
    %22 = vsyncpa [#allocation3], 0
    %23 = vsyncpa [#allocation5], 0
    %24 = vsyncpa [#allocation8], 0
    %25 = vsyncpa [#allocation11], 0
    %26 = vsyncpa [#allocation14], 0
    loop: start=0, step=1, limit=6
    $region2: #{_pinn_call.1} parent=1 // loop_pre_header
      _
    $region3: #{_pinn_call.1} parent=1 // loop_header
      %s28 = sphi 0, %s32
      %p29 = scmp.ge.s32.totalorder %s28, 6
      %s38 = sphi 0, %s40
      %s41 = sphi 0, %s38
      %s42 = sphi 0, %s41
      %s58 = sphi 0, %s42
      %s62 = sphi 0, %s62
      %s64 = sphi 0, %s62
      %s65 = sphi 0, %s64
      %s79 = sphi 0, %s65
      %s83 = sphi 0, %s83
      %s85 = sphi 0, %s83
      %s86 = sphi 0, %s85
      %s100 = sphi 0, %s86
      %s104 = sphi 0, %s104
      %s106 = sphi 0, %s104
      %s107 = sphi 0, %s106
      %s121 = sphi 0, %s107
      %s125 = sphi 0, %s125
      %s127 = sphi 0, %s125
      %s128 = sphi 0, %s127
      %s142 = sphi 0, %s128
      %s146 = sphi 0, %s146
      %s148 = sphi 0, %s146
      %s149 = sphi 0, %s148
      %s163 = sphi 0, %s149
      %s167 = sphi 0, %s167
      %s169 = sphi 0, %s167
      %s170 = sphi 0, %s169
      %s184 = sphi 0, %s170
      %s188 = sphi 0, %s188
      %s190 = sphi 0, %s188
      %s191 = sphi 0, %s190
      %s205 = sphi 0, %s191
      %s209 = sphi 0, %s209
      %s211 = sphi 0, %s209
      %s212 = sphi 0, %s211
      %s226 = sphi 0, %s212
      %s230 = sphi 0, %s230
      %s232 = sphi 0, %s230
      %s233 = sphi 0, %s232
      %s247 = sphi 0, %s233
      %s251 = sphi 0, %s251
      %s253 = sphi 0, %s251
      %s254 = sphi 0, %s253
      %s268 = sphi 0, %s254
      %s272 = sphi 0, %s272
      %s274 = sphi 0, %s272
      %s275 = sphi 0, %s274
      %s289 = sphi 0, %s275
      %s293 = sphi 0, %s293
      %s295 = sphi 0, %s293
      %s296 = sphi 0, %s295
      %s310 = sphi 0, %s296
      %s314 = sphi 0, %s314
      %s316 = sphi 0, %s314
      %s317 = sphi 0, %s316
      %s331 = sphi 0, %s317
      %s335 = sphi 0, %s335
      %s337 = sphi 0, %s335
      %s338 = sphi 0, %s337
      %s352 = sphi 0, %s338
      %s356 = sphi 0, %s356
      %s358 = sphi 0, %s356
      %s359 = sphi 0, %s358
      %s373 = sphi 0, %s359
      %s377 = sphi 0, %s377
      %s379 = sphi 0, %s377
      %s380 = sphi 0, %s379
      %s394 = sphi 0, %s380
      %s400 = sphi 0, %s402
      %s403 = sphi 0, %s400
      %s404 = sphi 0, %s403
      %s420 = sphi 0, %s404
    $region4: #{_pinn_call.1} parent=1 // loop_header_branch
      %31 = sbr.rel (%p29) target = $region8
    $region5: #{_pinn_call.1} parent=1 // loop_body
      %s33 = ssub.s32 %s28, 1
      %s34 = ssub.s32 %s28, 2
      %s35 = sadd.s32 %s28, 1
      %s36 = ssub.s32 %s28, %s35
      %p37 = scmp.eq.s32.totalorder %s36, 0
      %s39 = sadd.s32 %s38, 1
      %s40 = scalar_select %p37, %s38, %s39
      %p43 = pneg %p37
      %p44 = scmp.eq.s32.totalorder %s28, 3
      %p45 = por %p43, %p44
      %p46 = scmp.ne.s32.totalorder %s38, %s41
      %p47 = scmp.eq.s32.totalorder %s28, 0
      %p48 = por %p46, %p47
      %p49 = scmp.ne.s32.totalorder %s38, %s41
      %p50 = scmp.eq.s32.totalorder %s33, 3
      %p51 = por %p49, %p50
      %p52 = scmp.ne.s32.totalorder %s41, %s42
      %p53 = scmp.eq.s32.totalorder %s33, 0
      %p54 = por %p52, %p53
      %p55 = scmp.ne.s32.totalorder %s41, %s42
      %p56 = scmp.eq.s32.totalorder %s34, 3
      %p57 = por %p55, %p56
      %p59 = scmp.ne.s32.totalorder %s42, %s58
      %p60 = scmp.eq.s32.totalorder %s34, 0
      %p61 = por %p59, %p60
      %s63 = sadd.s32 %s62, 1
      %p66 = scmp.eq.s32.totalorder %s28, 3
      %p67 = scmp.ne.s32.totalorder %s62, %s64
      %p68 = scmp.eq.s32.totalorder %s28, 0
      %p69 = por %p67, %p68
      %p70 = scmp.ne.s32.totalorder %s62, %s64
      %p71 = scmp.eq.s32.totalorder %s33, 3
      %p72 = por %p70, %p71
      %p73 = scmp.ne.s32.totalorder %s64, %s65
      %p74 = scmp.eq.s32.totalorder %s33, 0
      %p75 = por %p73, %p74
      %p76 = scmp.ne.s32.totalorder %s64, %s65
      %p77 = scmp.eq.s32.totalorder %s34, 3
      %p78 = por %p76, %p77
      %p80 = scmp.ne.s32.totalorder %s65, %s79
      %p81 = scmp.eq.s32.totalorder %s34, 0
      %p82 = por %p80, %p81
      %s84 = sadd.s32 %s83, 1
      %p87 = scmp.eq.s32.totalorder %s28, 3
      %p88 = scmp.ne.s32.totalorder %s83, %s85
      %p89 = scmp.eq.s32.totalorder %s28, 0
      %p90 = por %p88, %p89
      %p91 = scmp.ne.s32.totalorder %s83, %s85
      %p92 = scmp.eq.s32.totalorder %s33, 3
      %p93 = por %p91, %p92
      %p94 = scmp.ne.s32.totalorder %s85, %s86
      %p95 = scmp.eq.s32.totalorder %s33, 0
      %p96 = por %p94, %p95
      %p97 = scmp.ne.s32.totalorder %s85, %s86
      %p98 = scmp.eq.s32.totalorder %s34, 3
      %p99 = por %p97, %p98
      %p101 = scmp.ne.s32.totalorder %s86, %s100
      %p102 = scmp.eq.s32.totalorder %s34, 0
      %p103 = por %p101, %p102
      %s105 = sadd.s32 %s104, 1
      %p108 = scmp.eq.s32.totalorder %s28, 3
      %p109 = scmp.ne.s32.totalorder %s104, %s106
      %p110 = scmp.eq.s32.totalorder %s28, 0
      %p111 = por %p109, %p110
      %p112 = scmp.ne.s32.totalorder %s104, %s106
      %p113 = scmp.eq.s32.totalorder %s33, 3
      %p114 = por %p112, %p113
      %p115 = scmp.ne.s32.totalorder %s106, %s107
      %p116 = scmp.eq.s32.totalorder %s33, 0
      %p117 = por %p115, %p116
      %p118 = scmp.ne.s32.totalorder %s106, %s107
      %p119 = scmp.eq.s32.totalorder %s34, 3
      %p120 = por %p118, %p119
      %p122 = scmp.ne.s32.totalorder %s107, %s121
      %p123 = scmp.eq.s32.totalorder %s34, 0
      %p124 = por %p122, %p123
      %s126 = sadd.s32 %s125, 1
      %p129 = scmp.eq.s32.totalorder %s28, 3
      %p130 = scmp.ne.s32.totalorder %s125, %s127
      %p131 = scmp.eq.s32.totalorder %s28, 0
      %p132 = por %p130, %p131
      %p133 = scmp.ne.s32.totalorder %s125, %s127
      %p134 = scmp.eq.s32.totalorder %s33, 3
      %p135 = por %p133, %p134
      %p136 = scmp.ne.s32.totalorder %s127, %s128
      %p137 = scmp.eq.s32.totalorder %s33, 0
      %p138 = por %p136, %p137
      %p139 = scmp.ne.s32.totalorder %s127, %s128
      %p140 = scmp.eq.s32.totalorder %s34, 3
      %p141 = por %p139, %p140
      %p143 = scmp.ne.s32.totalorder %s128, %s142
      %p144 = scmp.eq.s32.totalorder %s34, 0
      %p145 = por %p143, %p144
      %s147 = sadd.s32 %s146, 1
      %p150 = scmp.eq.s32.totalorder %s28, 3
      %p151 = scmp.ne.s32.totalorder %s146, %s148
      %p152 = scmp.eq.s32.totalorder %s28, 0
      %p153 = por %p151, %p152
      %p154 = scmp.ne.s32.totalorder %s146, %s148
      %p155 = scmp.eq.s32.totalorder %s33, 3
      %p156 = por %p154, %p155
      %p157 = scmp.ne.s32.totalorder %s148, %s149
      %p158 = scmp.eq.s32.totalorder %s33, 0
      %p159 = por %p157, %p158
      %p160 = scmp.ne.s32.totalorder %s148, %s149
      %p161 = scmp.eq.s32.totalorder %s34, 3
      %p162 = por %p160, %p161
      %p164 = scmp.ne.s32.totalorder %s149, %s163
      %p165 = scmp.eq.s32.totalorder %s34, 0
      %p166 = por %p164, %p165
      %s168 = sadd.s32 %s167, 1
      %p171 = scmp.eq.s32.totalorder %s28, 3
      %p172 = scmp.ne.s32.totalorder %s167, %s169
      %p173 = scmp.eq.s32.totalorder %s28, 0
      %p174 = por %p172, %p173
      %p175 = scmp.ne.s32.totalorder %s167, %s169
      %p176 = scmp.eq.s32.totalorder %s33, 3
      %p177 = por %p175, %p176
      %p178 = scmp.ne.s32.totalorder %s169, %s170
      %p179 = scmp.eq.s32.totalorder %s33, 0
      %p180 = por %p178, %p179
      %p181 = scmp.ne.s32.totalorder %s169, %s170
      %p182 = scmp.eq.s32.totalorder %s34, 3
      %p183 = por %p181, %p182
      %p185 = scmp.ne.s32.totalorder %s170, %s184
      %p186 = scmp.eq.s32.totalorder %s34, 0
      %p187 = por %p185, %p186
      %s189 = sadd.s32 %s188, 1
      %p192 = scmp.eq.s32.totalorder %s28, 3
      %p193 = scmp.ne.s32.totalorder %s188, %s190
      %p194 = scmp.eq.s32.totalorder %s28, 0
      %p195 = por %p193, %p194
      %p196 = scmp.ne.s32.totalorder %s188, %s190
      %p197 = scmp.eq.s32.totalorder %s33, 3
      %p198 = por %p196, %p197
      %p199 = scmp.ne.s32.totalorder %s190, %s191
      %p200 = scmp.eq.s32.totalorder %s33, 0
      %p201 = por %p199, %p200
      %p202 = scmp.ne.s32.totalorder %s190, %s191
      %p203 = scmp.eq.s32.totalorder %s34, 3
      %p204 = por %p202, %p203
      %p206 = scmp.ne.s32.totalorder %s191, %s205
      %p207 = scmp.eq.s32.totalorder %s34, 0
      %p208 = por %p206, %p207
      %s210 = sadd.s32 %s209, 1
      %p213 = scmp.eq.s32.totalorder %s28, 3
      %p214 = scmp.ne.s32.totalorder %s209, %s211
      %p215 = scmp.eq.s32.totalorder %s28, 0
      %p216 = por %p214, %p215
      %p217 = scmp.ne.s32.totalorder %s209, %s211
      %p218 = scmp.eq.s32.totalorder %s33, 3
      %p219 = por %p217, %p218
      %p220 = scmp.ne.s32.totalorder %s211, %s212
      %p221 = scmp.eq.s32.totalorder %s33, 0
      %p222 = por %p220, %p221
      %p223 = scmp.ne.s32.totalorder %s211, %s212
      %p224 = scmp.eq.s32.totalorder %s34, 3
      %p225 = por %p223, %p224
      %p227 = scmp.ne.s32.totalorder %s212, %s226
      %p228 = scmp.eq.s32.totalorder %s34, 0
      %p229 = por %p227, %p228
      %s231 = sadd.s32 %s230, 1
      %p234 = scmp.eq.s32.totalorder %s28, 3
      %p235 = scmp.ne.s32.totalorder %s230, %s232
      %p236 = scmp.eq.s32.totalorder %s28, 0
      %p237 = por %p235, %p236
      %p238 = scmp.ne.s32.totalorder %s230, %s232
      %p239 = scmp.eq.s32.totalorder %s33, 3
      %p240 = por %p238, %p239
      %p241 = scmp.ne.s32.totalorder %s232, %s233
      %p242 = scmp.eq.s32.totalorder %s33, 0
      %p243 = por %p241, %p242
      %p244 = scmp.ne.s32.totalorder %s232, %s233
      %p245 = scmp.eq.s32.totalorder %s34, 3
      %p246 = por %p244, %p245
      %p248 = scmp.ne.s32.totalorder %s233, %s247
      %p249 = scmp.eq.s32.totalorder %s34, 0
      %p250 = por %p248, %p249
      %s252 = sadd.s32 %s251, 1
      %p255 = scmp.eq.s32.totalorder %s28, 3
      %p256 = scmp.ne.s32.totalorder %s251, %s253
      %p257 = scmp.eq.s32.totalorder %s28, 0
      %p258 = por %p256, %p257
      %p259 = scmp.ne.s32.totalorder %s251, %s253
      %p260 = scmp.eq.s32.totalorder %s33, 3
      %p261 = por %p259, %p260
      %p262 = scmp.ne.s32.totalorder %s253, %s254
      %p263 = scmp.eq.s32.totalorder %s33, 0
      %p264 = por %p262, %p263
      %p265 = scmp.ne.s32.totalorder %s253, %s254
      %p266 = scmp.eq.s32.totalorder %s34, 3
      %p267 = por %p265, %p266
      %p269 = scmp.ne.s32.totalorder %s254, %s268
      %p270 = scmp.eq.s32.totalorder %s34, 0
      %p271 = por %p269, %p270
      %s273 = sadd.s32 %s272, 1
      %p276 = scmp.eq.s32.totalorder %s28, 3
      %p277 = scmp.ne.s32.totalorder %s272, %s274
      %p278 = scmp.eq.s32.totalorder %s28, 0
      %p279 = por %p277, %p278
      %p280 = scmp.ne.s32.totalorder %s272, %s274
      %p281 = scmp.eq.s32.totalorder %s33, 3
      %p282 = por %p280, %p281
      %p283 = scmp.ne.s32.totalorder %s274, %s275
      %p284 = scmp.eq.s32.totalorder %s33, 0
      %p285 = por %p283, %p284
      %p286 = scmp.ne.s32.totalorder %s274, %s275
      %p287 = scmp.eq.s32.totalorder %s34, 3
      %p288 = por %p286, %p287
      %p290 = scmp.ne.s32.totalorder %s275, %s289
      %p291 = scmp.eq.s32.totalorder %s34, 0
      %p292 = por %p290, %p291
      %s294 = sadd.s32 %s293, 1
      %p297 = scmp.eq.s32.totalorder %s28, 3
      %p298 = scmp.ne.s32.totalorder %s293, %s295
      %p299 = scmp.eq.s32.totalorder %s28, 0
      %p300 = por %p298, %p299
      %p301 = scmp.ne.s32.totalorder %s293, %s295
      %p302 = scmp.eq.s32.totalorder %s33, 3
      %p303 = por %p301, %p302
      %p304 = scmp.ne.s32.totalorder %s295, %s296
      %p305 = scmp.eq.s32.totalorder %s33, 0
      %p306 = por %p304, %p305
      %p307 = scmp.ne.s32.totalorder %s295, %s296
      %p308 = scmp.eq.s32.totalorder %s34, 3
      %p309 = por %p307, %p308
      %p311 = scmp.ne.s32.totalorder %s296, %s310
      %p312 = scmp.eq.s32.totalorder %s34, 0
      %p313 = por %p311, %p312
      %s315 = sadd.s32 %s314, 1
      %p318 = scmp.eq.s32.totalorder %s28, 3
      %p319 = scmp.ne.s32.totalorder %s314, %s316
      %p320 = scmp.eq.s32.totalorder %s28, 0
      %p321 = por %p319, %p320
      %p322 = scmp.ne.s32.totalorder %s314, %s316
      %p323 = scmp.eq.s32.totalorder %s33, 3
      %p324 = por %p322, %p323
      %p325 = scmp.ne.s32.totalorder %s316, %s317
      %p326 = scmp.eq.s32.totalorder %s33, 0
      %p327 = por %p325, %p326
      %p328 = scmp.ne.s32.totalorder %s316, %s317
      %p329 = scmp.eq.s32.totalorder %s34, 3
      %p330 = por %p328, %p329
      %p332 = scmp.ne.s32.totalorder %s317, %s331
      %p333 = scmp.eq.s32.totalorder %s34, 0
      %p334 = por %p332, %p333
      %s336 = sadd.s32 %s335, 1
      %p339 = scmp.eq.s32.totalorder %s28, 3
      %p340 = scmp.ne.s32.totalorder %s335, %s337
      %p341 = scmp.eq.s32.totalorder %s28, 0
      %p342 = por %p340, %p341
      %p343 = scmp.ne.s32.totalorder %s335, %s337
      %p344 = scmp.eq.s32.totalorder %s33, 3
      %p345 = por %p343, %p344
      %p346 = scmp.ne.s32.totalorder %s337, %s338
      %p347 = scmp.eq.s32.totalorder %s33, 0
      %p348 = por %p346, %p347
      %p349 = scmp.ne.s32.totalorder %s337, %s338
      %p350 = scmp.eq.s32.totalorder %s34, 3
      %p351 = por %p349, %p350
      %p353 = scmp.ne.s32.totalorder %s338, %s352
      %p354 = scmp.eq.s32.totalorder %s34, 0
      %p355 = por %p353, %p354
      %s357 = sadd.s32 %s356, 1
      %p360 = scmp.eq.s32.totalorder %s28, 3
      %p361 = scmp.ne.s32.totalorder %s356, %s358
      %p362 = scmp.eq.s32.totalorder %s28, 0
      %p363 = por %p361, %p362
      %p364 = scmp.ne.s32.totalorder %s356, %s358
      %p365 = scmp.eq.s32.totalorder %s33, 3
      %p366 = por %p364, %p365
      %p367 = scmp.ne.s32.totalorder %s358, %s359
      %p368 = scmp.eq.s32.totalorder %s33, 0
      %p369 = por %p367, %p368
      %p370 = scmp.ne.s32.totalorder %s358, %s359
      %p371 = scmp.eq.s32.totalorder %s34, 3
      %p372 = por %p370, %p371
      %p374 = scmp.ne.s32.totalorder %s359, %s373
      %p375 = scmp.eq.s32.totalorder %s34, 0
      %p376 = por %p374, %p375
      %s378 = sadd.s32 %s377, 1
      %p381 = scmp.eq.s32.totalorder %s28, 3
      %p382 = scmp.ne.s32.totalorder %s377, %s379
      %p383 = scmp.eq.s32.totalorder %s28, 0
      %p384 = por %p382, %p383
      %p385 = scmp.ne.s32.totalorder %s377, %s379
      %p386 = scmp.eq.s32.totalorder %s33, 3
      %p387 = por %p385, %p386
      %p388 = scmp.ne.s32.totalorder %s379, %s380
      %p389 = scmp.eq.s32.totalorder %s33, 0
      %p390 = por %p388, %p389
      %p391 = scmp.ne.s32.totalorder %s379, %s380
      %p392 = scmp.eq.s32.totalorder %s34, 3
      %p393 = por %p391, %p392
      %p395 = scmp.ne.s32.totalorder %s380, %s394
      %p396 = scmp.eq.s32.totalorder %s34, 0
      %p397 = por %p395, %p396
      %s398 = ssub.s32 %s28, %s35
      %p399 = scmp.eq.s32.totalorder %s398, 0
      %s401 = sadd.s32 %s400, 1
      %s402 = scalar_select %p399, %s400, %s401
      %p405 = pneg %p399
      %p406 = scmp.eq.s32.totalorder %s28, 3
      %p407 = por %p405, %p406
      %p408 = scmp.ne.s32.totalorder %s400, %s403
      %p409 = scmp.eq.s32.totalorder %s28, 0
      %p410 = por %p408, %p409
      %p411 = scmp.ne.s32.totalorder %s400, %s403
      %p412 = scmp.eq.s32.totalorder %s33, 3
      %p413 = por %p411, %p412
      %p414 = scmp.ne.s32.totalorder %s403, %s404
      %p415 = scmp.eq.s32.totalorder %s33, 0
      %p416 = por %p414, %p415
      %p417 = scmp.ne.s32.totalorder %s403, %s404
      %p418 = scmp.eq.s32.totalorder %s34, 3
      %p419 = por %p417, %p418
      %p421 = scmp.ne.s32.totalorder %s404, %s420
      %p422 = scmp.eq.s32.totalorder %s34, 0
      %p423 = por %p421, %p422
      %p424 = scmp.le.s32.totalorder 1, %s28
      %p425 = scmp.lt.s32.totalorder %s28, 5
      %p426 = pnand %p424, %p425
      %p427 = pneg %p426
      // Predicated region
      $region9: #{_pinn_call.1} parent=5 // pred_check
        _
      $region10: #{_pinn_call.1} parent=5 // pred_check_branch
        %429 = sbr.rel (%p426) target = $region12
      $region11: #{_pinn_call.1} parent=5 // pred_region
        %s430 = ssub.s32 %s28, 1
        // Predicated region
        $region13: #{_pinn_call.1} parent=11 // pred_check
          %p431 = pneg %p75
        $region14: #{_pinn_call.1} parent=11 // pred_check_branch
          %433 = sbr.rel (%p431) target = $region16
        $region15: #{_pinn_call.1} parent=11 // pred_region
          %435 = vsyncadd [#allocation3], 0
          %s437 = sshll.u32 %s1, 4
          %s438 = int_to_ptr.hbm [resolvable:$true] %s437
          %s439 = sshll.u32 [#allocation2], 4
          %s440 = int_to_ptr.vmem [resolvable:$true] %s439
          %442 = dma.hbm_to_vmem [thread:$0]  %s438, 64, %s440, [#allocation3]
        $region16: #{_pinn_call.1} parent=11 // pred_fallthru
          _
        // Predicated region
        $region17: #{_pinn_call.1} parent=11 // pred_check
          %p443 = pneg %p96
        $region18: #{_pinn_call.1} parent=11 // pred_check_branch
          %445 = sbr.rel (%p443) target = $region20
        $region19: #{_pinn_call.1} parent=11 // pred_region
          %447 = vsyncadd [#allocation5], 0
          %s449 = sshll.u32 %s2, 4
          %s450 = int_to_ptr.hbm [resolvable:$true] %s449
          %s451 = sshll.u32 [#allocation4], 4
          %s452 = int_to_ptr.vmem [resolvable:$true] %s451
          %454 = dma.hbm_to_vmem [thread:$0]  %s450, 16, %s452, [#allocation5]
        $region20: #{_pinn_call.1} parent=11 // pred_fallthru
          _
        // Predicated region
        $region21: #{_pinn_call.1} parent=11 // pred_check
          %p455 = pneg %p117
        $region22: #{_pinn_call.1} parent=11 // pred_check_branch
          %457 = sbr.rel (%p455) target = $region24
        $region23: #{_pinn_call.1} parent=11 // pred_region
          _
        $region24: #{_pinn_call.1} parent=11 // pred_fallthru
          _
        // Predicated region
        $region25: #{_pinn_call.1} parent=11 // pred_check
          %p458 = pneg %p138
        $region26: #{_pinn_call.1} parent=11 // pred_check_branch
          %460 = sbr.rel (%p458) target = $region28
        $region27: #{_pinn_call.1} parent=11 // pred_region
          %462 = vsyncadd [#allocation5], 0
          %s464 = sshll.u32 %s4, 4
          %s465 = int_to_ptr.hbm [resolvable:$true] %s464
          %s466 = sshll.u32 [#allocation6], 4
          %s467 = int_to_ptr.vmem [resolvable:$true] %s466
          %469 = dma.hbm_to_vmem [thread:$0]  %s465, 16, %s467, [#allocation5]
        $region28: #{_pinn_call.1} parent=11 // pred_fallthru
          _
        // Predicated region
        $region29: #{_pinn_call.1} parent=11 // pred_check
          %p470 = pneg %p159
        $region30: #{_pinn_call.1} parent=11 // pred_check_branch
          %472 = sbr.rel (%p470) target = $region32
        $region31: #{_pinn_call.1} parent=11 // pred_region
          _
        $region32: #{_pinn_call.1} parent=11 // pred_fallthru
          _
        // Predicated region
        $region33: #{_pinn_call.1} parent=11 // pred_check
          %p473 = pneg %p180
        $region34: #{_pinn_call.1} parent=11 // pred_check_branch
          %475 = sbr.rel (%p473) target = $region36
        $region35: #{_pinn_call.1} parent=11 // pred_region
          %477 = vsyncadd [#allocation8], 0
          %s479 = sshll.u32 %s6, 4
          %s480 = int_to_ptr.hbm [resolvable:$true] %s479
          %s481 = sshll.u32 [#allocation7], 4
          %s482 = int_to_ptr.vmem [resolvable:$true] %s481
          %484 = dma.hbm_to_vmem [thread:$0]  %s480, 16, %s482, [#allocation8]
        $region36: #{_pinn_call.1} parent=11 // pred_fallthru
          _
        // Predicated region
        $region37: #{_pinn_call.1} parent=11 // pred_check
          %p485 = pneg %p201
        $region38: #{_pinn_call.1} parent=11 // pred_check_branch
          %487 = sbr.rel (%p485) target = $region40
        $region39: #{_pinn_call.1} parent=11 // pred_region
          _
        $region40: #{_pinn_call.1} parent=11 // pred_fallthru
          _
        // Predicated region
        $region41: #{_pinn_call.1} parent=11 // pred_check
          %p488 = pneg %p222
        $region42: #{_pinn_call.1} parent=11 // pred_check_branch
          %490 = sbr.rel (%p488) target = $region44
        $region43: #{_pinn_call.1} parent=11 // pred_region
          %492 = vsyncadd [#allocation8], 0
          %s494 = sshll.u32 %s8, 4
          %s495 = int_to_ptr.hbm [resolvable:$true] %s494
          %s496 = sshll.u32 [#allocation9], 4
          %s497 = int_to_ptr.vmem [resolvable:$true] %s496
          %499 = dma.hbm_to_vmem [thread:$0]  %s495, 16, %s497, [#allocation8]
        $region44: #{_pinn_call.1} parent=11 // pred_fallthru
          _
        // Predicated region
        $region45: #{_pinn_call.1} parent=11 // pred_check
          %p500 = pneg %p243
        $region46: #{_pinn_call.1} parent=11 // pred_check_branch
          %502 = sbr.rel (%p500) target = $region48
        $region47: #{_pinn_call.1} parent=11 // pred_region
          %504 = vsyncadd [#allocation11], 0
          %s505 = sshll.u32 %s9, 4
          %s506 = int_to_ptr.hbm [resolvable:$true] %s505
          %s507 = sshll.u32 [#allocation10], 4
          %s508 = int_to_ptr.vmem [resolvable:$true] %s507
          %513 = dma.hbm_to_vmem [thread:$0]  %s506, 1024, %s508, [#allocation11], 64, 64, 4
        $region48: #{_pinn_call.1} parent=11 // pred_fallthru
          _
        // Predicated region
        $region49: #{_pinn_call.1} parent=11 // pred_check
          %p514 = pneg %p264
        $region50: #{_pinn_call.1} parent=11 // pred_check_branch
          %516 = sbr.rel (%p514) target = $region52
        $region51: #{_pinn_call.1} parent=11 // pred_region
          %518 = vsyncadd [#allocation11], 0
          %s520 = sshll.u32 %s10, 4
          %s521 = int_to_ptr.hbm [resolvable:$true] %s520
          %s522 = sshll.u32 [#allocation12], 4
          %s523 = int_to_ptr.vmem [resolvable:$true] %s522
          %525 = dma.hbm_to_vmem [thread:$0]  %s521, 16, %s523, [#allocation11]
        $region52: #{_pinn_call.1} parent=11 // pred_fallthru
          _
        // Predicated region
        $region53: #{_pinn_call.1} parent=11 // pred_check
          %p526 = pneg %p285
        $region54: #{_pinn_call.1} parent=11 // pred_check_branch
          %528 = sbr.rel (%p526) target = $region56
        $region55: #{_pinn_call.1} parent=11 // pred_region
          %530 = vsyncadd [#allocation14], 0
          %s531 = sshll.u32 %s11, 4
          %s532 = int_to_ptr.hbm [resolvable:$true] %s531
          %s533 = sshll.u32 [#allocation13], 4
          %s534 = int_to_ptr.vmem [resolvable:$true] %s533
          %539 = dma.hbm_to_vmem [thread:$0]  %s532, 1024, %s534, [#allocation14], 64, 64, 4
        $region56: #{_pinn_call.1} parent=11 // pred_fallthru
          _
        // Predicated region
        $region57: #{_pinn_call.1} parent=11 // pred_check
          %p540 = pneg %p306
        $region58: #{_pinn_call.1} parent=11 // pred_check_branch
          %542 = sbr.rel (%p540) target = $region60
        $region59: #{_pinn_call.1} parent=11 // pred_region
          _
        $region60: #{_pinn_call.1} parent=11 // pred_fallthru
          _
        // Predicated region
        $region61: #{_pinn_call.1} parent=11 // pred_check
          %p543 = pneg %p327
        $region62: #{_pinn_call.1} parent=11 // pred_check_branch
          %545 = sbr.rel (%p543) target = $region64
        $region63: #{_pinn_call.1} parent=11 // pred_region
          %547 = vsyncadd [#allocation14], 0
          %s548 = sshll.u32 %s13, 4
          %s549 = int_to_ptr.hbm [resolvable:$true] %s548
          %s550 = sshll.u32 [#allocation15], 4
          %s551 = int_to_ptr.vmem [resolvable:$true] %s550
          %556 = dma.hbm_to_vmem [thread:$0]  %s549, 1024, %s551, [#allocation14], 64, 64, 4
        $region64: #{_pinn_call.1} parent=11 // pred_fallthru
          _
        // Predicated region
        $region65: #{_pinn_call.1} parent=11 // pred_check
          %p557 = pneg %p348
        $region66: #{_pinn_call.1} parent=11 // pred_check_branch
          %559 = sbr.rel (%p557) target = $region68
        $region67: #{_pinn_call.1} parent=11 // pred_region
          _
        $region68: #{_pinn_call.1} parent=11 // pred_fallthru
          _
        // Predicated region
        $region69: #{_pinn_call.1} parent=11 // pred_check
          %p560 = pneg %p369
        $region70: #{_pinn_call.1} parent=11 // pred_check_branch
          %562 = sbr.rel (%p560) target = $region72
        $region71: #{_pinn_call.1} parent=11 // pred_region
          _
        $region72: #{_pinn_call.1} parent=11 // pred_fallthru
          _
        // Predicated region
        $region73: #{_pinn_call.1} parent=11 // pred_check
          %p563 = pneg %p390
        $region74: #{_pinn_call.1} parent=11 // pred_check_branch
          %565 = sbr.rel (%p563) target = $region76
        $region75: #{_pinn_call.1} parent=11 // pred_region
          _
        $region76: #{_pinn_call.1} parent=11 // pred_fallthru
          _
      $region12: #{_pinn_call.1} parent=5 // pred_fallthru
        _
      %p566 = scmp.lt.s32.totalorder %s28, 4
      // Predicated region
      $region77: #{_pinn_call.1} parent=5 // pred_check
        %p567 = pneg %p566
      $region78: #{_pinn_call.1} parent=5 // pred_check_branch
        %569 = sbr.rel (%p567) target = $region80
      $region79: #{_pinn_call.1} parent=5 // pred_region
        // Predicated region
        $region81: #{_pinn_call.1} parent=79 // pred_check
          %p570 = pneg %p48
        $region82: #{_pinn_call.1} parent=79 // pred_check_branch
          %572 = sbr.rel (%p570) target = $region84
        $region83: #{_pinn_call.1} parent=79 // pred_region
          %s573 = smul.u32 7, %s28
          %p574 = scmp.lt.s32.totalorder %s573, 27
          %s575 = scalar_select %p574, %s573, 27
          %s576 = smul.addr %s575, 4
          %s577 = scalar_lea.vmem %s0, %s576
          %s578 = smul.u32 7, %s28
        $region84: #{_pinn_call.1} parent=79 // pred_fallthru
          _
      $region80: #{_pinn_call.1} parent=5 // pred_fallthru
        _
      %p579 = scmp.le.s32.totalorder 1, %s28
      %p580 = scmp.lt.s32.totalorder %s28, 5
      %p581 = pnand %p579, %p580
      %p582 = pneg %p581
      // Predicated region
      $region85: #{_pinn_call.1} parent=5 // pred_check
        _
      $region86: #{_pinn_call.1} parent=5 // pred_check_branch
        %584 = sbr.rel (%p581) target = $region88
      $region87: #{_pinn_call.1} parent=5 // pred_region
        %s585 = ssub.s32 %s28, 1
        // Predicated region
        $region89: #{_pinn_call.1} parent=87 // pred_check
          %p586 = pneg %p75
        $region90: #{_pinn_call.1} parent=87 // pred_check_branch
          %588 = sbr.rel (%p586) target = $region92
        $region91: #{_pinn_call.1} parent=87 // pred_region
          %590 = dma.done [#allocation3], 64
        $region92: #{_pinn_call.1} parent=87 // pred_fallthru
          _
        // Predicated region
        $region93: #{_pinn_call.1} parent=87 // pred_check
          %p591 = pneg %p96
        $region94: #{_pinn_call.1} parent=87 // pred_check_branch
          %593 = sbr.rel (%p591) target = $region96
        $region95: #{_pinn_call.1} parent=87 // pred_region
          %595 = dma.done [#allocation5], 16
        $region96: #{_pinn_call.1} parent=87 // pred_fallthru
          _
        // Predicated region
        $region97: #{_pinn_call.1} parent=87 // pred_check
          %p596 = pneg %p138
        $region98: #{_pinn_call.1} parent=87 // pred_check_branch
          %598 = sbr.rel (%p596) target = $region100
        $region99: #{_pinn_call.1} parent=87 // pred_region
          %600 = dma.done [#allocation5], 16
        $region100: #{_pinn_call.1} parent=87 // pred_fallthru
          _
        // Predicated region
        $region101: #{_pinn_call.1} parent=87 // pred_check
          %p601 = pneg %p180
        $region102: #{_pinn_call.1} parent=87 // pred_check_branch
          %603 = sbr.rel (%p601) target = $region104
        $region103: #{_pinn_call.1} parent=87 // pred_region
          %605 = dma.done [#allocation8], 16
        $region104: #{_pinn_call.1} parent=87 // pred_fallthru
          _
        // Predicated region
        $region105: #{_pinn_call.1} parent=87 // pred_check
          %p606 = pneg %p222
        $region106: #{_pinn_call.1} parent=87 // pred_check_branch
          %608 = sbr.rel (%p606) target = $region108
        $region107: #{_pinn_call.1} parent=87 // pred_region
          %610 = dma.done [#allocation8], 16
        $region108: #{_pinn_call.1} parent=87 // pred_fallthru
          _
        // Predicated region
        $region109: #{_pinn_call.1} parent=87 // pred_check
          %p611 = pneg %p243
        $region110: #{_pinn_call.1} parent=87 // pred_check_branch
          %613 = sbr.rel (%p611) target = $region112
        $region111: #{_pinn_call.1} parent=87 // pred_region
          %615 = dma.done [#allocation11], 1024
        $region112: #{_pinn_call.1} parent=87 // pred_fallthru
          _
        // Predicated region
        $region113: #{_pinn_call.1} parent=87 // pred_check
          %p616 = pneg %p264
        $region114: #{_pinn_call.1} parent=87 // pred_check_branch
          %618 = sbr.rel (%p616) target = $region116
        $region115: #{_pinn_call.1} parent=87 // pred_region
          %620 = dma.done [#allocation11], 16
        $region116: #{_pinn_call.1} parent=87 // pred_fallthru
          _
        // Predicated region
        $region117: #{_pinn_call.1} parent=87 // pred_check
          %p621 = pneg %p285
        $region118: #{_pinn_call.1} parent=87 // pred_check_branch
          %623 = sbr.rel (%p621) target = $region120
        $region119: #{_pinn_call.1} parent=87 // pred_region
          %625 = dma.done [#allocation14], 1024
        $region120: #{_pinn_call.1} parent=87 // pred_fallthru
          _
        // Predicated region
        $region121: #{_pinn_call.1} parent=87 // pred_check
          %p626 = pneg %p327
        $region122: #{_pinn_call.1} parent=87 // pred_check_branch
          %628 = sbr.rel (%p626) target = $region124
        $region123: #{_pinn_call.1} parent=87 // pred_region
          %630 = dma.done [#allocation14], 1024
        $region124: #{_pinn_call.1} parent=87 // pred_fallthru
          _
        %s631 = smul.u32 7, %s33
        %p632 = scmp.lt.s32.totalorder %s631, 27
        %s633 = scalar_select %p632, %s631, 27
        %s634 = smul.addr %s633, 4
        %s635 = scalar_lea.vmem %s0, %s634
        %p636 = pneg %p54
        %p637 = pneg %p51
        %p638 = pneg %p75
        %p639 = pneg %p72
        %p640 = pneg %p96
        %p641 = pneg %p93
        %p642 = pneg %p117
        %p643 = pneg %p114
        %p644 = pneg %p138
        %p645 = pneg %p135
        %p646 = pneg %p159
        %p647 = pneg %p156
        %p648 = pneg %p180
        %p649 = pneg %p177
        %p650 = pneg %p201
        %p651 = pneg %p198
        %p652 = pneg %p222
        %p653 = pneg %p219
        %p654 = pneg %p243
        %p655 = pneg %p240
        %p656 = pneg %p264
        %p657 = pneg %p261
        %p658 = pneg %p285
        %p659 = pneg %p282
        %p660 = pneg %p306
        %p661 = pneg %p303
        %p662 = pneg %p327
        %p663 = pneg %p324
        %p664 = pneg %p348
        %p665 = pneg %p345
        %p666 = pneg %p369
        %p667 = pneg %p366
        %p668 = pneg %p390
        %p669 = pneg %p387
        %p670 = pneg %p416
        %p671 = pneg %p413
        %s672 = smul.u32 7, %s33
        %p673 = scmp.lt.s32.totalorder %s672, 27
        %s674 = scalar_select %p673, %s672, 27
        %s675 = smul.addr %s674, 8
        %s676 = scalar_lea.vmem %s17, %s675
        %s677 = smul.u32 7, %s33
        %p678 = scmp.lt.s32.totalorder %s677, 27
        %s679 = scalar_select %p678, %s677, 27
        %s680 = smul.addr %s679, 4
        %s681 = scalar_lea.vmem %s0, %s680
        %s682 = smul.u32 7, %s33
        %s683 = smul.u32 7, %s33
        %p684 = scmp.lt.s32.totalorder %s683, 27
        %s685 = scalar_select %p684, %s683, 27
        %s686 = smul.addr %s685, 8
        %s687 = scalar_lea.vmem %s17, %s686
        %s688 = smul.u32 7, %s33
        %v690 = vld [vmem:[%s681] sm:$0xf]
        %v691 = vld [vmem:[%s681 + $0x4] sm:$0xf]
        %v692 = vld [vmem:[%s681 + $0x8] sm:$0xf]
        %v693 = vld [vmem:[%s681 + $0xc] sm:$0xf]
        %v694 = vld [vmem:[%s681 + $0x10] sm:$0xf]
        %v695 = vld [vmem:[%s681 + $0x14] sm:$0xf]
        %v696 = vld [vmem:[%s681 + $0x18] sm:$0xf]
        %v697 = vld [vmem:[#allocation2] sm:$0xf]
        %v698 = vld [vmem:[#allocation4] sm:$0x1]
        %v700 = vperm.slane %v698, 0
        %v709 = vunpack.c.l.b16 %v690
        %v710 = vunpack.c.l.b16 %v691
        %v711 = vunpack.c.l.b16 %v692
        %v712 = vunpack.c.l.b16 %v693
        %v713 = vunpack.c.l.b16 %v694
        %v714 = vunpack.c.l.b16 %v695
        %v715 = vunpack.c.l.b16 %v696
        %v716 = vpack.c.b16 %v710, %v709
        %v717 = vpack.c.b16 %v712, %v711
        %v718 = vpack.c.b16 %v714, %v713
        %v719 = vpack.c.b16 %v715, %v715
        %vm720 = vcmask 64512
        %v722 = vsel %vm720, %v716, 0
        %v725 = vsel %vm720, %v717, 0
        %v728 = vsel %vm720, %v718, 0
        %v731 = vsel %vm720, %v719, 0
        %vm733 = vcmask 1043456
        %v735 = vsel %vm733, %v697, 0
        %737 = vmatpush.bf16.msra.mxu0 0
        %738 = vmatpush.bf16.msra.mxu0 0
        %739 = vmatpush.bf16.msra.mxu0 0
        %740 = vmatpush.bf16.msra.mxu0 0
        %741 = vmatpush.bf16.msra.mxu0 0
        %742 = vmatpush.bf16.msra.mxu0 0
        %743 = vmatpush.bf16.msra.mxu0 0
        %744 = vmatpush.bf16.msra.mxu0 %v735
        %745 = vmatmul.bf16.gmra.mxu0 %v722
        %v746 = vpop.f32.mrf.mxu0
        %v747 = vadd.f32 %v700, %v746
        %v748 = vpop.f32.mrf.mxu0
        %v749 = vadd.f32 %v700, %v748
        %750 = vmatmul.bf16.gmra.mxu0 %v725
        %v751 = vpop.f32.mrf.mxu0
        %v752 = vadd.f32 %v700, %v751
        %v753 = vpop.f32.mrf.mxu0
        %v754 = vadd.f32 %v700, %v753
        %755 = vmatmul.bf16.gmra.mxu0 %v728
        %v756 = vpop.f32.mrf.mxu0
        %v757 = vadd.f32 %v700, %v756
        %v758 = vpop.f32.mrf.mxu0
        %v759 = vadd.f32 %v700, %v758
        %760 = vmatmul.bf16.gmra.mxu0 %v731
        %v761 = vpop.f32.mrf.mxu0
        %v762 = vadd.f32 %v700, %v761
        %v763 = vpop.f32.mrf.mxu0
        %764 = vdwg.mxu0
        %v765 = vtanh.pop %v747
        %v766 = vtanh.pop %v749
        %v767 = vtanh.pop %v752
        %v768 = vtanh.pop %v754
        %v769 = vtanh.pop %v757
        %v770 = vtanh.pop %v759
        %v771 = vtanh.pop %v762
        %v772 = vpack.c.bf16 %v766, %v765
        %v773 = vpack.c.bf16 %v768, %v767
        %v774 = vpack.c.bf16 %v770, %v769
        %v775 = vpack.c.bf16 %v771, %v771
        %v776 = vld [vmem:[%s3] sm:$0xf]
        %v777 = vld [vmem:[%s3 + $0x4] sm:$0xf]
        %v778 = vld [vmem:[%s3 + $0x8] sm:$0xf]
        %v779 = vld [vmem:[%s3 + $0xc] sm:$0xf]
        %v780 = vld [vmem:[%s3 + $0x10] sm:$0xf]
        %v781 = vld [vmem:[%s3 + $0x14] sm:$0xf]
        %v782 = vld [vmem:[%s3 + $0x18] sm:$0xf]
        %v783 = vld [vmem:[%s3 + $0x1c] sm:$0xf]
        %v784 = vld [vmem:[%s3 + $0x20] sm:$0xf]
        %v785 = vld [vmem:[%s3 + $0x24] sm:$0xf]
        %v786 = vld [vmem:[%s3 + $0x28] sm:$0xf]
        %v787 = vld [vmem:[%s3 + $0x2c] sm:$0xf]
        %v788 = vld [vmem:[%s3 + $0x30] sm:$0xf]
        %v789 = vld [vmem:[%s3 + $0x34] sm:$0xf]
        %v790 = vld [vmem:[%s3 + $0x38] sm:$0xf]
        %v791 = vld [vmem:[%s3 + $0x3c] sm:$0xf]
        %v792 = vld [vmem:[#allocation6] sm:$0x1]
        %v794 = vperm.slane %v792, 0
        %v812 = vunpack.c.l.b16 %v776
        %v813 = vunpack.c.l.b16 %v777
        %v814 = vunpack.c.l.b16 %v778
        %v815 = vunpack.c.l.b16 %v779
        %v816 = vunpack.c.l.b16 %v780
        %v817 = vunpack.c.l.b16 %v781
        %v818 = vunpack.c.l.b16 %v782
        %v819 = vunpack.c.l.b16 %v783
        %v820 = vunpack.c.l.b16 %v784
        %v821 = vunpack.c.l.b16 %v785
        %v822 = vunpack.c.l.b16 %v786
        %v823 = vunpack.c.l.b16 %v787
        %v824 = vunpack.c.l.b16 %v788
        %v825 = vunpack.c.l.b16 %v789
        %v826 = vunpack.c.l.b16 %v790
        %v827 = vunpack.c.l.b16 %v791
        %v828 = vpack.c.b16 %v813, %v812
        %v829 = vpack.c.b16 %v815, %v814
        %v830 = vpack.c.b16 %v817, %v816
        %v831 = vpack.c.b16 %v819, %v818
        %v832 = vpack.c.b16 %v821, %v820
        %v833 = vpack.c.b16 %v823, %v822
        %v834 = vpack.c.b16 %v825, %v824
        %v835 = vpack.c.b16 %v827, %v826
        %844 = vmatpush.bf16.msra.mxu0 %v835
        %845 = vmatpush.bf16.msra.mxu0 %v834
        %846 = vmatpush.bf16.msra.mxu0 %v833
        %847 = vmatpush.bf16.msra.mxu0 %v832
        %848 = vmatpush.bf16.msra.mxu0 %v831
        %849 = vmatpush.bf16.msra.mxu0 %v830
        %850 = vmatpush.bf16.msra.mxu0 %v829
        %851 = vmatpush.bf16.msra.mxu0 %v828
        %852 = vmatmul.bf16.gmra.mxu0 %v772
        %v853 = vpop.f32.mrf.mxu0
        %v854 = vadd.f32 %v794, %v853
        %v855 = vpop.f32.mrf.mxu0
        %v856 = vadd.f32 %v794, %v855
        %857 = vmatmul.bf16.gmra.mxu0 %v773
        %v858 = vpop.f32.mrf.mxu0
        %v859 = vadd.f32 %v794, %v858
        %v860 = vpop.f32.mrf.mxu0
        %v861 = vadd.f32 %v794, %v860
        %862 = vmatmul.bf16.gmra.mxu0 %v774
        %v863 = vpop.f32.mrf.mxu0
        %v864 = vadd.f32 %v794, %v863
        %v865 = vpop.f32.mrf.mxu0
        %v866 = vadd.f32 %v794, %v865
        %867 = vmatmul.bf16.gmra.mxu0 %v775
        %v868 = vpop.f32.mrf.mxu0
        %v869 = vadd.f32 %v794, %v868
        %v870 = vpop.f32.mrf.mxu0
        %871 = vdwg.mxu0
        %v872 = vtanh.pop %v854
        %v873 = vtanh.pop %v856
        %v874 = vtanh.pop %v859
        %v875 = vtanh.pop %v861
        %v876 = vtanh.pop %v864
        %v877 = vtanh.pop %v866
        %v878 = vtanh.pop %v869
        %v879 = vpack.c.bf16 %v873, %v872
        %v880 = vpack.c.bf16 %v875, %v874
        %v881 = vpack.c.bf16 %v877, %v876
        %v882 = vpack.c.bf16 %v878, %v878
        %v883 = vld [vmem:[%s5] sm:$0xf]
        %v884 = vld [vmem:[%s5 + $0x4] sm:$0xf]
        %v885 = vld [vmem:[%s5 + $0x8] sm:$0xf]
        %v886 = vld [vmem:[%s5 + $0xc] sm:$0xf]
        %v887 = vld [vmem:[%s5 + $0x10] sm:$0xf]
        %v888 = vld [vmem:[%s5 + $0x14] sm:$0xf]
        %v889 = vld [vmem:[%s5 + $0x18] sm:$0xf]
        %v890 = vld [vmem:[%s5 + $0x1c] sm:$0xf]
        %v891 = vld [vmem:[%s5 + $0x20] sm:$0xf]
        %v892 = vld [vmem:[%s5 + $0x24] sm:$0xf]
        %v893 = vld [vmem:[%s5 + $0x28] sm:$0xf]
        %v894 = vld [vmem:[%s5 + $0x2c] sm:$0xf]
        %v895 = vld [vmem:[%s5 + $0x30] sm:$0xf]
        %v896 = vld [vmem:[%s5 + $0x34] sm:$0xf]
        %v897 = vld [vmem:[%s5 + $0x38] sm:$0xf]
        %v898 = vld [vmem:[%s5 + $0x3c] sm:$0xf]
        %v899 = vld [vmem:[#allocation7] sm:$0x1]
        %v901 = vperm.slane %v899, 0
        %v919 = vunpack.c.l.b16 %v883
        %v920 = vunpack.c.l.b16 %v884
        %v921 = vunpack.c.l.b16 %v885
        %v922 = vunpack.c.l.b16 %v886
        %v923 = vunpack.c.l.b16 %v887
        %v924 = vunpack.c.l.b16 %v888
        %v925 = vunpack.c.l.b16 %v889
        %v926 = vunpack.c.l.b16 %v890
        %v927 = vunpack.c.l.b16 %v891
        %v928 = vunpack.c.l.b16 %v892
        %v929 = vunpack.c.l.b16 %v893
        %v930 = vunpack.c.l.b16 %v894
        %v931 = vunpack.c.l.b16 %v895
        %v932 = vunpack.c.l.b16 %v896
        %v933 = vunpack.c.l.b16 %v897
        %v934 = vunpack.c.l.b16 %v898
        %v935 = vpack.c.b16 %v920, %v919
        %v936 = vpack.c.b16 %v922, %v921
        %v937 = vpack.c.b16 %v924, %v923
        %v938 = vpack.c.b16 %v926, %v925
        %v939 = vpack.c.b16 %v928, %v927
        %v940 = vpack.c.b16 %v930, %v929
        %v941 = vpack.c.b16 %v932, %v931
        %v942 = vpack.c.b16 %v934, %v933
        %951 = vmatpush.bf16.msra.mxu0 %v942
        %952 = vmatpush.bf16.msra.mxu0 %v941
        %953 = vmatpush.bf16.msra.mxu0 %v940
        %954 = vmatpush.bf16.msra.mxu0 %v939
        %955 = vmatpush.bf16.msra.mxu0 %v938
        %956 = vmatpush.bf16.msra.mxu0 %v937
        %957 = vmatpush.bf16.msra.mxu0 %v936
        %958 = vmatpush.bf16.msra.mxu0 %v935
        %959 = vmatmul.bf16.gmra.mxu0 %v879
        %v960 = vpop.f32.mrf.mxu0
        %v961 = vadd.f32 %v901, %v960
        %v962 = vpop.f32.mrf.mxu0
        %v963 = vadd.f32 %v901, %v962
        %964 = vmatmul.bf16.gmra.mxu0 %v880
        %v965 = vpop.f32.mrf.mxu0
        %v966 = vadd.f32 %v901, %v965
        %v967 = vpop.f32.mrf.mxu0
        %v968 = vadd.f32 %v901, %v967
        %969 = vmatmul.bf16.gmra.mxu0 %v881
        %v970 = vpop.f32.mrf.mxu0
        %v971 = vadd.f32 %v901, %v970
        %v972 = vpop.f32.mrf.mxu0
        %v973 = vadd.f32 %v901, %v972
        %974 = vmatmul.bf16.gmra.mxu0 %v882
        %v975 = vpop.f32.mrf.mxu0
        %v976 = vadd.f32 %v901, %v975
        %v977 = vpop.f32.mrf.mxu0
        %978 = vdwg.mxu0
        %v979 = vtanh.pop %v961
        %v980 = vtanh.pop %v963
        %v981 = vtanh.pop %v966
        %v982 = vtanh.pop %v968
        %v983 = vtanh.pop %v971
        %v984 = vtanh.pop %v973
        %v985 = vtanh.pop %v976
        %v986 = vpack.c.bf16 %v980, %v979
        %v987 = vpack.c.bf16 %v982, %v981
        %v988 = vpack.c.bf16 %v984, %v983
        %v989 = vpack.c.bf16 %v985, %v985
        %v990 = vld [vmem:[%s7] sm:$0xf]
        %v991 = vld [vmem:[%s7 + $0x4] sm:$0xf]
        %v992 = vld [vmem:[%s7 + $0x8] sm:$0xf]
        %v993 = vld [vmem:[%s7 + $0xc] sm:$0xf]
        %v994 = vld [vmem:[%s7 + $0x10] sm:$0xf]
        %v995 = vld [vmem:[%s7 + $0x14] sm:$0xf]
        %v996 = vld [vmem:[%s7 + $0x18] sm:$0xf]
        %v997 = vld [vmem:[%s7 + $0x1c] sm:$0xf]
        %v998 = vld [vmem:[%s7 + $0x20] sm:$0xf]
        %v999 = vld [vmem:[%s7 + $0x24] sm:$0xf]
        %v1000 = vld [vmem:[%s7 + $0x28] sm:$0xf]
        %v1001 = vld [vmem:[%s7 + $0x2c] sm:$0xf]
        %v1002 = vld [vmem:[%s7 + $0x30] sm:$0xf]
        %v1003 = vld [vmem:[%s7 + $0x34] sm:$0xf]
        %v1004 = vld [vmem:[%s7 + $0x38] sm:$0xf]
        %v1005 = vld [vmem:[%s7 + $0x3c] sm:$0xf]
        %v1006 = vld [vmem:[#allocation9] sm:$0x1]
        %v1008 = vperm.slane %v1006, 0
        %v1026 = vunpack.c.l.b16 %v990
        %v1027 = vunpack.c.l.b16 %v991
        %v1028 = vunpack.c.l.b16 %v992
        %v1029 = vunpack.c.l.b16 %v993
        %v1030 = vunpack.c.l.b16 %v994
        %v1031 = vunpack.c.l.b16 %v995
        %v1032 = vunpack.c.l.b16 %v996
        %v1033 = vunpack.c.l.b16 %v997
        %v1034 = vunpack.c.l.b16 %v998
        %v1035 = vunpack.c.l.b16 %v999
        %v1036 = vunpack.c.l.b16 %v1000
        %v1037 = vunpack.c.l.b16 %v1001
        %v1038 = vunpack.c.l.b16 %v1002
        %v1039 = vunpack.c.l.b16 %v1003
        %v1040 = vunpack.c.l.b16 %v1004
        %v1041 = vunpack.c.l.b16 %v1005
        %v1042 = vpack.c.b16 %v1027, %v1026
        %v1043 = vpack.c.b16 %v1029, %v1028
        %v1044 = vpack.c.b16 %v1031, %v1030
        %v1045 = vpack.c.b16 %v1033, %v1032
        %v1046 = vpack.c.b16 %v1035, %v1034
        %v1047 = vpack.c.b16 %v1037, %v1036
        %v1048 = vpack.c.b16 %v1039, %v1038
        %v1049 = vpack.c.b16 %v1041, %v1040
        %1058 = vmatpush.bf16.msra.mxu0 %v1049
        %1059 = vmatpush.bf16.msra.mxu0 %v1048
        %1060 = vmatpush.bf16.msra.mxu0 %v1047
        %1061 = vmatpush.bf16.msra.mxu0 %v1046
        %1062 = vmatpush.bf16.msra.mxu0 %v1045
        %1063 = vmatpush.bf16.msra.mxu0 %v1044
        %1064 = vmatpush.bf16.msra.mxu0 %v1043
        %1065 = vmatpush.bf16.msra.mxu0 %v1042
        %1066 = vmatmul.bf16.gmra.mxu0 %v986
        %v1067 = vpop.f32.mrf.mxu0
        %v1068 = vadd.f32 %v1008, %v1067
        %v1069 = vpop.f32.mrf.mxu0
        %v1070 = vadd.f32 %v1008, %v1069
        %1071 = vmatmul.bf16.gmra.mxu0 %v987
        %v1072 = vpop.f32.mrf.mxu0
        %v1073 = vadd.f32 %v1008, %v1072
        %v1074 = vpop.f32.mrf.mxu0
        %v1075 = vadd.f32 %v1008, %v1074
        %1076 = vmatmul.bf16.gmra.mxu0 %v988
        %v1077 = vpop.f32.mrf.mxu0
        %v1078 = vadd.f32 %v1008, %v1077
        %v1079 = vpop.f32.mrf.mxu0
        %v1080 = vadd.f32 %v1008, %v1079
        %1081 = vmatmul.bf16.gmra.mxu0 %v989
        %v1082 = vpop.f32.mrf.mxu0
        %v1083 = vadd.f32 %v1008, %v1082
        %v1084 = vpop.f32.mrf.mxu0
        %1085 = vdwg.mxu0
        %v1086 = vtanh.pop %v1068
        %v1087 = vtanh.pop %v1070
        %v1088 = vtanh.pop %v1073
        %v1089 = vtanh.pop %v1075
        %v1090 = vtanh.pop %v1078
        %v1091 = vtanh.pop %v1080
        %v1092 = vtanh.pop %v1083
        %v1093 = vpack.c.bf16 %v1087, %v1086
        %v1094 = vpack.c.bf16 %v1089, %v1088
        %v1095 = vpack.c.bf16 %v1091, %v1090
        %v1096 = vpack.c.bf16 %v1092, %v1092
        %v1097 = vld [vmem:[#allocation10] sm:$0xf]
        %v1098 = vld [vmem:[#allocation10 + $0x4] sm:$0xf]
        %v1099 = vld [vmem:[#allocation10 + $0x8] sm:$0xf]
        %v1100 = vld [vmem:[#allocation10 + $0xc] sm:$0xf]
        %v1101 = vld [vmem:[#allocation10 + $0x10] sm:$0xf]
        %v1102 = vld [vmem:[#allocation10 + $0x14] sm:$0xf]
        %v1103 = vld [vmem:[#allocation10 + $0x18] sm:$0xf]
        %v1104 = vld [vmem:[#allocation10 + $0x1c] sm:$0xf]
        %v1105 = vld [vmem:[#allocation10 + $0x20] sm:$0xf]
        %v1106 = vld [vmem:[#allocation10 + $0x24] sm:$0xf]
        %v1107 = vld [vmem:[#allocation10 + $0x28] sm:$0xf]
        %v1108 = vld [vmem:[#allocation10 + $0x2c] sm:$0xf]
        %v1109 = vld [vmem:[#allocation10 + $0x30] sm:$0xf]
        %v1110 = vld [vmem:[#allocation10 + $0x34] sm:$0xf]
        %v1111 = vld [vmem:[#allocation10 + $0x38] sm:$0xf]
        %v1112 = vld [vmem:[#allocation10 + $0x3c] sm:$0xf]
        %v1113 = vld [vmem:[#allocation12] sm:$0x1]
        %v1115 = vperm.slane %v1113, 0
        %v1133 = vunpack.c.l.b16 %v1097
        %v1134 = vunpack.c.l.b16 %v1098
        %v1135 = vunpack.c.l.b16 %v1099
        %v1136 = vunpack.c.l.b16 %v1100
        %v1137 = vunpack.c.l.b16 %v1101
        %v1138 = vunpack.c.l.b16 %v1102
        %v1139 = vunpack.c.l.b16 %v1103
        %v1140 = vunpack.c.l.b16 %v1104
        %v1141 = vunpack.c.l.b16 %v1105
        %v1142 = vunpack.c.l.b16 %v1106
        %v1143 = vunpack.c.l.b16 %v1107
        %v1144 = vunpack.c.l.b16 %v1108
        %v1145 = vunpack.c.l.b16 %v1109
        %v1146 = vunpack.c.l.b16 %v1110
        %v1147 = vunpack.c.l.b16 %v1111
        %v1148 = vunpack.c.l.b16 %v1112
        %v1149 = vpack.c.b16 %v1134, %v1133
        %v1150 = vpack.c.b16 %v1136, %v1135
        %v1151 = vpack.c.b16 %v1138, %v1137
        %v1152 = vpack.c.b16 %v1140, %v1139
        %v1153 = vpack.c.b16 %v1142, %v1141
        %v1154 = vpack.c.b16 %v1144, %v1143
        %v1155 = vpack.c.b16 %v1146, %v1145
        %v1156 = vpack.c.b16 %v1148, %v1147
        %1165 = vmatpush.bf16.msra.mxu0 %v1156
        %1166 = vmatpush.bf16.msra.mxu0 %v1155
        %1167 = vmatpush.bf16.msra.mxu0 %v1154
        %1168 = vmatpush.bf16.msra.mxu0 %v1153
        %1169 = vmatpush.bf16.msra.mxu0 %v1152
        %1170 = vmatpush.bf16.msra.mxu0 %v1151
        %1171 = vmatpush.bf16.msra.mxu0 %v1150
        %1172 = vmatpush.bf16.msra.mxu0 %v1149
        %1173 = vmatmul.bf16.gmra.mxu0 %v1093
        %v1174 = vpop.f32.mrf.mxu0
        %v1175 = vadd.f32 %v1115, %v1174
        %v1176 = vpop.f32.mrf.mxu0
        %v1177 = vadd.f32 %v1115, %v1176
        %1178 = vmatmul.bf16.gmra.mxu0 %v1094
        %v1179 = vpop.f32.mrf.mxu0
        %v1180 = vadd.f32 %v1115, %v1179
        %v1181 = vpop.f32.mrf.mxu0
        %v1182 = vadd.f32 %v1115, %v1181
        %1183 = vmatmul.bf16.gmra.mxu0 %v1095
        %v1184 = vpop.f32.mrf.mxu0
        %v1185 = vadd.f32 %v1115, %v1184
        %v1186 = vpop.f32.mrf.mxu0
        %v1187 = vadd.f32 %v1115, %v1186
        %1188 = vmatmul.bf16.gmra.mxu0 %v1096
        %v1189 = vpop.f32.mrf.mxu0
        %v1190 = vadd.f32 %v1115, %v1189
        %v1191 = vpop.f32.mrf.mxu0
        %1192 = vdwg.mxu0
        %v1193 = vtanh.pop %v1175
        %v1194 = vtanh.pop %v1177
        %v1195 = vtanh.pop %v1180
        %v1196 = vtanh.pop %v1182
        %v1197 = vtanh.pop %v1185
        %v1198 = vtanh.pop %v1187
        %v1199 = vtanh.pop %v1190
        %v1200 = vpack.c.bf16 %v1194, %v1193
        %v1201 = vpack.c.bf16 %v1196, %v1195
        %v1202 = vpack.c.bf16 %v1198, %v1197
        %v1203 = vpack.c.bf16 %v1199, %v1199
        %v1204 = vld [vmem:[#allocation13] sm:$0xf]
        %v1205 = vld [vmem:[#allocation13 + $0x4] sm:$0xf]
        %v1206 = vld [vmem:[#allocation13 + $0x8] sm:$0xf]
        %v1207 = vld [vmem:[#allocation13 + $0xc] sm:$0xf]
        %v1208 = vld [vmem:[#allocation13 + $0x10] sm:$0xf]
        %v1209 = vld [vmem:[#allocation13 + $0x14] sm:$0xf]
        %v1210 = vld [vmem:[#allocation13 + $0x18] sm:$0xf]
        %v1211 = vld [vmem:[#allocation13 + $0x1c] sm:$0xf]
        %v1212 = vld [vmem:[#allocation13 + $0x20] sm:$0xf]
        %v1213 = vld [vmem:[#allocation13 + $0x24] sm:$0xf]
        %v1214 = vld [vmem:[#allocation13 + $0x28] sm:$0xf]
        %v1215 = vld [vmem:[#allocation13 + $0x2c] sm:$0xf]
        %v1216 = vld [vmem:[#allocation13 + $0x30] sm:$0xf]
        %v1217 = vld [vmem:[#allocation13 + $0x34] sm:$0xf]
        %v1218 = vld [vmem:[#allocation13 + $0x38] sm:$0xf]
        %v1219 = vld [vmem:[#allocation13 + $0x3c] sm:$0xf]
        %v1220 = vld [vmem:[%s12] sm:$0x1]
        %v1222 = vperm.slane %v1220, 0
        %v1240 = vunpack.c.l.b16 %v1204
        %v1241 = vunpack.c.l.b16 %v1205
        %v1242 = vunpack.c.l.b16 %v1206
        %v1243 = vunpack.c.l.b16 %v1207
        %v1244 = vunpack.c.l.b16 %v1208
        %v1245 = vunpack.c.l.b16 %v1209
        %v1246 = vunpack.c.l.b16 %v1210
        %v1247 = vunpack.c.l.b16 %v1211
        %v1248 = vunpack.c.l.b16 %v1212
        %v1249 = vunpack.c.l.b16 %v1213
        %v1250 = vunpack.c.l.b16 %v1214
        %v1251 = vunpack.c.l.b16 %v1215
        %v1252 = vunpack.c.l.b16 %v1216
        %v1253 = vunpack.c.l.b16 %v1217
        %v1254 = vunpack.c.l.b16 %v1218
        %v1255 = vunpack.c.l.b16 %v1219
        %v1256 = vpack.c.b16 %v1241, %v1240
        %v1257 = vpack.c.b16 %v1243, %v1242
        %v1258 = vpack.c.b16 %v1245, %v1244
        %v1259 = vpack.c.b16 %v1247, %v1246
        %v1260 = vpack.c.b16 %v1249, %v1248
        %v1261 = vpack.c.b16 %v1251, %v1250
        %v1262 = vpack.c.b16 %v1253, %v1252
        %v1263 = vpack.c.b16 %v1255, %v1254
        %1272 = vmatpush.bf16.msra.mxu0 %v1263
        %1273 = vmatpush.bf16.msra.mxu0 %v1262
        %1274 = vmatpush.bf16.msra.mxu0 %v1261
        %1275 = vmatpush.bf16.msra.mxu0 %v1260
        %1276 = vmatpush.bf16.msra.mxu0 %v1259
        %1277 = vmatpush.bf16.msra.mxu0 %v1258
        %1278 = vmatpush.bf16.msra.mxu0 %v1257
        %1279 = vmatpush.bf16.msra.mxu0 %v1256
        %1280 = vmatmul.bf16.gmra.mxu0 %v1200
        %v1281 = vpop.f32.mrf.mxu0
        %v1282 = vadd.f32 %v1222, %v1281
        %v1283 = vpop.f32.mrf.mxu0
        %v1284 = vadd.f32 %v1222, %v1283
        %1285 = vmatmul.bf16.gmra.mxu0 %v1201
        %v1286 = vpop.f32.mrf.mxu0
        %v1287 = vadd.f32 %v1222, %v1286
        %v1288 = vpop.f32.mrf.mxu0
        %v1289 = vadd.f32 %v1222, %v1288
        %1290 = vmatmul.bf16.gmra.mxu0 %v1202
        %v1291 = vpop.f32.mrf.mxu0
        %v1292 = vadd.f32 %v1222, %v1291
        %v1293 = vpop.f32.mrf.mxu0
        %v1294 = vadd.f32 %v1222, %v1293
        %1295 = vmatmul.bf16.gmra.mxu0 %v1203
        %v1296 = vpop.f32.mrf.mxu0
        %v1297 = vadd.f32 %v1222, %v1296
        %v1298 = vpop.f32.mrf.mxu0
        %1299 = vdwg.mxu0
        %v1300 = vtanh.pop %v1282
        %v1301 = vtanh.pop %v1284
        %v1302 = vtanh.pop %v1287
        %v1303 = vtanh.pop %v1289
        %v1304 = vtanh.pop %v1292
        %v1305 = vtanh.pop %v1294
        %v1306 = vtanh.pop %v1297
        %v1307 = vpack.c.bf16 %v1301, %v1300
        %v1308 = vpack.c.bf16 %v1303, %v1302
        %v1309 = vpack.c.bf16 %v1305, %v1304
        %v1310 = vpack.c.bf16 %v1306, %v1306
        %v1311 = vld [vmem:[#allocation15] sm:$0xf]
        %v1312 = vld [vmem:[#allocation15 + $0x4] sm:$0xf]
        %v1313 = vld [vmem:[#allocation15 + $0x8] sm:$0xf]
        %v1314 = vld [vmem:[#allocation15 + $0xc] sm:$0xf]
        %v1315 = vld [vmem:[#allocation15 + $0x10] sm:$0xf]
        %v1316 = vld [vmem:[#allocation15 + $0x14] sm:$0xf]
        %v1317 = vld [vmem:[#allocation15 + $0x18] sm:$0xf]
        %v1318 = vld [vmem:[#allocation15 + $0x1c] sm:$0xf]
        %v1319 = vld [vmem:[#allocation15 + $0x20] sm:$0xf]
        %v1320 = vld [vmem:[#allocation15 + $0x24] sm:$0xf]
        %v1321 = vld [vmem:[#allocation15 + $0x28] sm:$0xf]
        %v1322 = vld [vmem:[#allocation15 + $0x2c] sm:$0xf]
        %v1323 = vld [vmem:[#allocation15 + $0x30] sm:$0xf]
        %v1324 = vld [vmem:[#allocation15 + $0x34] sm:$0xf]
        %v1325 = vld [vmem:[#allocation15 + $0x38] sm:$0xf]
        %v1326 = vld [vmem:[#allocation15 + $0x3c] sm:$0xf]
        %v1327 = vld [vmem:[%s14] sm:$0x1]
        %v1329 = vperm.slane %v1327, 0
        %v1347 = vunpack.c.l.b16 %v1311
        %v1348 = vunpack.c.l.b16 %v1312
        %v1349 = vunpack.c.l.b16 %v1313
        %v1350 = vunpack.c.l.b16 %v1314
        %v1351 = vunpack.c.l.b16 %v1315
        %v1352 = vunpack.c.l.b16 %v1316
        %v1353 = vunpack.c.l.b16 %v1317
        %v1354 = vunpack.c.l.b16 %v1318
        %v1355 = vunpack.c.l.b16 %v1319
        %v1356 = vunpack.c.l.b16 %v1320
        %v1357 = vunpack.c.l.b16 %v1321
        %v1358 = vunpack.c.l.b16 %v1322
        %v1359 = vunpack.c.l.b16 %v1323
        %v1360 = vunpack.c.l.b16 %v1324
        %v1361 = vunpack.c.l.b16 %v1325
        %v1362 = vunpack.c.l.b16 %v1326
        %v1363 = vpack.c.b16 %v1348, %v1347
        %v1364 = vpack.c.b16 %v1350, %v1349
        %v1365 = vpack.c.b16 %v1352, %v1351
        %v1366 = vpack.c.b16 %v1354, %v1353
        %v1367 = vpack.c.b16 %v1356, %v1355
        %v1368 = vpack.c.b16 %v1358, %v1357
        %v1369 = vpack.c.b16 %v1360, %v1359
        %v1370 = vpack.c.b16 %v1362, %v1361
        %1379 = vmatpush.bf16.msra.mxu0 %v1370
        %1380 = vmatpush.bf16.msra.mxu0 %v1369
        %1381 = vmatpush.bf16.msra.mxu0 %v1368
        %1382 = vmatpush.bf16.msra.mxu0 %v1367
        %1383 = vmatpush.bf16.msra.mxu0 %v1366
        %1384 = vmatpush.bf16.msra.mxu0 %v1365
        %1385 = vmatpush.bf16.msra.mxu0 %v1364
        %1386 = vmatpush.bf16.msra.mxu0 %v1363
        %1387 = vmatmul.bf16.gmra.mxu0 %v1307
        %v1388 = vpop.f32.mrf.mxu0
        %v1389 = vadd.f32 %v1329, %v1388
        %v1390 = vpop.f32.mrf.mxu0
        %v1391 = vadd.f32 %v1329, %v1390
        %1392 = vmatmul.bf16.gmra.mxu0 %v1308
        %v1393 = vpop.f32.mrf.mxu0
        %v1394 = vadd.f32 %v1329, %v1393
        %v1395 = vpop.f32.mrf.mxu0
        %v1396 = vadd.f32 %v1329, %v1395
        %1397 = vmatmul.bf16.gmra.mxu0 %v1309
        %v1398 = vpop.f32.mrf.mxu0
        %v1399 = vadd.f32 %v1329, %v1398
        %v1400 = vpop.f32.mrf.mxu0
        %v1401 = vadd.f32 %v1329, %v1400
        %1402 = vmatmul.bf16.gmra.mxu0 %v1310
        %v1403 = vpop.f32.mrf.mxu0
        %v1404 = vadd.f32 %v1329, %v1403
        %v1405 = vpop.f32.mrf.mxu0
        %1406 = vdwg.mxu0
        %v1407 = vtanh.pop %v1389
        %v1408 = vtanh.pop %v1391
        %v1409 = vtanh.pop %v1394
        %v1410 = vtanh.pop %v1396
        %v1411 = vtanh.pop %v1399
        %v1412 = vtanh.pop %v1401
        %v1413 = vtanh.pop %v1404
        %v1414 = vpack.c.bf16 %v1408, %v1407
        %v1415 = vpack.c.bf16 %v1410, %v1409
        %v1416 = vpack.c.bf16 %v1412, %v1411
        %v1417 = vpack.c.bf16 %v1413, %v1413
        %v1418 = vld [vmem:[%s15] sm:$0xf]
        %v1419 = vld [vmem:[%s15 + $0x4] sm:$0xf]
        %v1420 = vld [vmem:[%s15 + $0x8] sm:$0xf]
        %v1421 = vld [vmem:[%s15 + $0xc] sm:$0xf]
        %v1422 = vld [vmem:[%s15 + $0x10] sm:$0xf]
        %v1423 = vld [vmem:[%s15 + $0x14] sm:$0xf]
        %v1424 = vld [vmem:[%s15 + $0x18] sm:$0xf]
        %v1425 = vld [vmem:[%s15 + $0x1c] sm:$0xf]
        %v1426 = vld [vmem:[%s15 + $0x20] sm:$0xf]
        %v1427 = vld [vmem:[%s15 + $0x24] sm:$0xf]
        %v1428 = vld [vmem:[%s15 + $0x28] sm:$0xf]
        %v1429 = vld [vmem:[%s15 + $0x2c] sm:$0xf]
        %v1430 = vld [vmem:[%s15 + $0x30] sm:$0xf]
        %v1431 = vld [vmem:[%s15 + $0x34] sm:$0xf]
        %v1432 = vld [vmem:[%s15 + $0x38] sm:$0xf]
        %v1433 = vld [vmem:[%s15 + $0x3c] sm:$0xf]
        %v1434 = vld [vmem:[%s16] sm:$0x1]
        %v1436 = vperm.slane %v1434, 0
        %v1454 = vunpack.c.l.b16 %v1418
        %v1455 = vunpack.c.l.b16 %v1419
        %v1456 = vunpack.c.l.b16 %v1420
        %v1457 = vunpack.c.l.b16 %v1421
        %v1458 = vunpack.c.l.b16 %v1422
        %v1459 = vunpack.c.l.b16 %v1423
        %v1460 = vunpack.c.l.b16 %v1424
        %v1461 = vunpack.c.l.b16 %v1425
        %v1462 = vunpack.c.l.b16 %v1426
        %v1463 = vunpack.c.l.b16 %v1427
        %v1464 = vunpack.c.l.b16 %v1428
        %v1465 = vunpack.c.l.b16 %v1429
        %v1466 = vunpack.c.l.b16 %v1430
        %v1467 = vunpack.c.l.b16 %v1431
        %v1468 = vunpack.c.l.b16 %v1432
        %v1469 = vunpack.c.l.b16 %v1433
        %v1470 = vpack.c.b16 %v1455, %v1454
        %v1471 = vpack.c.b16 %v1457, %v1456
        %v1472 = vpack.c.b16 %v1459, %v1458
        %v1473 = vpack.c.b16 %v1461, %v1460
        %v1474 = vpack.c.b16 %v1463, %v1462
        %v1475 = vpack.c.b16 %v1465, %v1464
        %v1476 = vpack.c.b16 %v1467, %v1466
        %v1477 = vpack.c.b16 %v1469, %v1468
        %1486 = vmatpush.bf16.msra.mxu0 %v1477
        %1487 = vmatpush.bf16.msra.mxu0 %v1476
        %1488 = vmatpush.bf16.msra.mxu0 %v1475
        %1489 = vmatpush.bf16.msra.mxu0 %v1474
        %1490 = vmatpush.bf16.msra.mxu0 %v1473
        %1491 = vmatpush.bf16.msra.mxu0 %v1472
        %1492 = vmatpush.bf16.msra.mxu0 %v1471
        %1493 = vmatpush.bf16.msra.mxu0 %v1470
        %1494 = vmatmul.bf16.gmra.mxu0 %v1414
        %v1495 = vpop.f32.mrf.mxu0
        %v1496 = vadd.f32 %v1436, %v1495
        %v1497 = vpop.f32.mrf.mxu0
        %v1498 = vadd.f32 %v1436, %v1497
        %1499 = vmatmul.bf16.gmra.mxu0 %v1415
        %v1500 = vpop.f32.mrf.mxu0
        %v1501 = vadd.f32 %v1436, %v1500
        %v1502 = vpop.f32.mrf.mxu0
        %v1503 = vadd.f32 %v1436, %v1502
        %1504 = vmatmul.bf16.gmra.mxu0 %v1416
        %v1505 = vpop.f32.mrf.mxu0
        %v1506 = vadd.f32 %v1436, %v1505
        %v1507 = vpop.f32.mrf.mxu0
        %v1508 = vadd.f32 %v1436, %v1507
        %1509 = vmatmul.bf16.gmra.mxu0 %v1417
        %v1510 = vpop.f32.mrf.mxu0
        %v1511 = vadd.f32 %v1436, %v1510
        %v1512 = vpop.f32.mrf.mxu0
        %1513 = vdwg.mxu0
        %1514 = vst.msk [vmem:[%s687] sm:$0xff] %vm720, %v1496
        %1515 = vst.msk [vmem:[%s687 + $0x8] sm:$0xff] %vm720, %v1498
        %1516 = vst.msk [vmem:[%s687 + $0x10] sm:$0xff] %vm720, %v1501
        %1517 = vst.msk [vmem:[%s687 + $0x18] sm:$0xff] %vm720, %v1503
        %1518 = vst.msk [vmem:[%s687 + $0x20] sm:$0xff] %vm720, %v1506
        %1519 = vst.msk [vmem:[%s687 + $0x28] sm:$0xff] %vm720, %v1508
        %1520 = vst.msk [vmem:[%s687 + $0x30] sm:$0xff] %vm720, %v1511
        %s1521 = smul.u32 7, %s33
        %p1522 = scmp.lt.s32.totalorder %s1521, 27
        %s1523 = scalar_select %p1522, %s1521, 27
        %s1524 = smul.addr %s1523, 8
        %s1525 = scalar_lea.vmem %s17, %s1524
        // Predicated region
        $region125: #{_pinn_call.1} parent=87 // pred_check
          %p1526 = pneg %p413
        $region126: #{_pinn_call.1} parent=87 // pred_check_branch
          %1528 = sbr.rel (%p1526) target = $region128
        $region127: #{_pinn_call.1} parent=87 // pred_region
          %s1529 = smul.u32 7, %s33
        $region128: #{_pinn_call.1} parent=87 // pred_fallthru
          _
      $region88: #{_pinn_call.1} parent=5 // pred_fallthru
        _
      %p1530 = scmp.le.s32.totalorder 2, %s28
      // Predicated region
      $region129: #{_pinn_call.1} parent=5 // pred_check
        %p1531 = pneg %p1530
      $region130: #{_pinn_call.1} parent=5 // pred_check_branch
        %1533 = sbr.rel (%p1531) target = $region132
      $region131: #{_pinn_call.1} parent=5 // pred_region
        %s1534 = ssub.s32 %s28, 2
        // Predicated region
        $region133: #{_pinn_call.1} parent=131 // pred_check
          %p1535 = pneg %p419
        $region134: #{_pinn_call.1} parent=131 // pred_check_branch
          %1537 = sbr.rel (%p1535) target = $region136
        $region135: #{_pinn_call.1} parent=131 // pred_region
          %s1538 = smul.u32 7, %s34
          %p1539 = scmp.lt.s32.totalorder %s1538, 27
          %s1540 = scalar_select %p1539, %s1538, 27
          %s1541 = smul.addr %s1540, 8
          %s1542 = scalar_lea.vmem %s17, %s1541
        $region136: #{_pinn_call.1} parent=131 // pred_fallthru
          _
      $region132: #{_pinn_call.1} parent=5 // pred_fallthru
        _
    $region6: #{_pinn_call.1} parent=1 // loop_footer
      %s32 = sadd.s32 1, %s28
    $region7: #{_pinn_call.1} parent=1 // loop_footer_branch
      %27 = sbr.rel target = $region3
    $region8: #{_pinn_call.1} parent=1 // loop_exit
      _
    %1543 = vsyncpa [#allocation3], 1
    %s1544 = scalar_lea.sflag [#allocation3], 1
    %1545 = vsyncpa %s1544, 1
    %1546 = vsyncpa [#allocation5], 1
    %1547 = vsyncpa [#allocation8], 1
    %1548 = vsyncpa [#allocation11], 1
    %1549 = vsyncpa [#allocation14], 1

</llo_original>
